<compile_context>
chip_gen: v7x
topology: tpu7x:2x2x1
jax: 0.10.0
libtpu: 0.0.40
codegen_flags: <defaults>
</compile_context>

<pallas_src>
import math
from functools import partial

import jax
import jax.numpy as jnp
from jax.experimental import pallas as pl
from jax.experimental.pallas import tpu as pltpu

LANE = 128


# ----------------------------------------------------------------------------
# Helpers
# ----------------------------------------------------------------------------
def _rup(n, m=LANE):
    return ((n + m - 1) // m) * m


def _pad_axis(a, axis, target):
    pad = target - a.shape[axis]
    if pad <= 0:
        return a
    widths = [(0, 0)] * a.ndim
    widths[axis] = (0, pad)
    return jnp.pad(a, widths)


def _bf16(a):
    return a.astype(jnp.bfloat16)


def _masked_layer_norm(v, g, b, d_real, eps=1e-5):
    """Two-pass LayerNorm over the first d_real entries of the last axis.

    Assumes columns >= d_real of `v` are exactly zero (the padding invariant
    maintained by the kernel), so sums over the padded axis equal sums over the
    real axis; centered values are masked so the padded tail stays zero."""
    dp = v.shape[-1]
    inv_d = jnp.float32(1.0 / d_real)
    mu = jnp.sum(v, axis=-1, keepdims=True) * inv_d
    xc = v - mu
    if d_real != dp:
        mask = jax.lax.broadcasted_iota(jnp.int32, v.shape, v.ndim - 1) < d_real
        xc = jnp.where(mask, xc, 0.0)
    var = jnp.sum(xc * xc, axis=-1, keepdims=True) * inv_d
    return xc * jax.lax.rsqrt(var + eps) * g + b


def _vmem_limit(default=48 * 1024 * 1024):
    try:
        info = pltpu.get_tpu_info()
        cap = getattr(info, "vmem_capacity_bytes", None)
        if cap:
            return int(cap * 3 // 4)   # 96 MiB on v5e/v6e, 48 MiB on v7x
    except Exception:
        pass
    return default


def _pick_tb(B, T, target_rows=256):
    """Largest divisor of B with tb*T <= target_rows, keeping >=2 batch tiles
    (so v7x's two TensorCores both get work along the parallel axis)."""
    cap = max(1, target_rows // max(T, 1))
    best = 1
    for cand in range(1, B + 1):
        if B % cand:
            continue
        if cand > cap:
            continue
        if B >= 2 and B // cand < 2:
            continue
        best = cand
    return best


# ----------------------------------------------------------------------------
# Fused Pallas kernel: all encoder blocks + final linear
# ----------------------------------------------------------------------------
def _fused_kernel(x_ref,
                  wq_ref, bq_ref, wk_ref, bk_ref,
                  ln1g_ref, ln1b_ref,
                  w1_ref, b1_ref, w2_ref, b2_ref,
                  ln2g_ref, ln2b_ref,
                  ow_ref, ob_ref,
                  out_ref, attnw_ref,
                  x_sc,
                  *, d_real):
    l = pl.program_id(1)
    n_l = pl.num_programs(1)

    # Load X into the VMEM carry at the first layer of each batch tile.
    @pl.when(l == 0)
    def _():
        x_sc[...] = x_ref[...]

    x = x_sc[...]                                   # (tb, T, Dp) f32
    tb, T, Dp = x.shape
    x2 = x.reshape(tb * T, Dp)
    x2b = _bf16(x2)

    # --- dpnn5 attention (assumed): Linear Q/K -> hidden, un-projected V ------
    # 1/sqrt(hidden) scale pre-folded into (wq, bq). Weights already bf16.
    qh = jnp.dot(x2b, wq_ref[l], preferred_element_type=jnp.float32) + bq_ref[l]
    kh = jnp.dot(x2b, wk_ref[l], preferred_element_type=jnp.float32) + bk_ref[l]
    qhb, khb = _bf16(qh), _bf16(kh)

    if tb == 1:
        # Single-tile path: plain 2-D MXU matmuls (no tiny batched GEMMs).
        scores = jax.lax.dot_general(qhb, khb, (((1,), (1,)), ((), ())),
                                     preferred_element_type=jnp.float32)  # (T, T)
        scores = scores - jnp.max(scores, axis=-1, keepdims=True)
        e = jnp.exp(scores)
        weights = e / jnp.sum(e, axis=-1, keepdims=True)   # exact softmax
        attnw_ref[...] = weights.reshape(tb, T, T).astype(attnw_ref.dtype)
        attn_out = jnp.dot(_bf16(weights), x2b,
                           preferred_element_type=jnp.float32)           # (T, Dp)
        attn_out = attn_out.reshape(tb, T, Dp)
    else:
        Hp = qh.shape[-1]
        qh3 = qhb.reshape(tb, T, Hp)
        kh3 = khb.reshape(tb, T, Hp)
        scores = jnp.einsum('bth,bsh->bts', qh3, kh3,
                            preferred_element_type=jnp.float32)          # (tb,T,T)
        scores = scores - jnp.max(scores, axis=-1, keepdims=True)
        e = jnp.exp(scores)
        weights = e / jnp.sum(e, axis=-1, keepdims=True)
        attnw_ref[...] = weights.astype(attnw_ref.dtype)
        attn_out = jnp.einsum('bts,bsd->btd', _bf16(weights), _bf16(x),
                              preferred_element_type=jnp.float32)

    # --- norm1(X + attn_out) ---------------------------------------------------
    res = _masked_layer_norm(x + attn_out, ln1g_ref[l], ln1b_ref[l], d_real)

    # --- FFN: Linear -> ReLU -> Linear (flattened 2-D matmuls) ------------------
    res2b = _bf16(res.reshape(tb * T, Dp))
    h = jnp.dot(res2b, w1_ref[l], preferred_element_type=jnp.float32) + b1_ref[l]
    h = jnp.maximum(h, 0.0)
    ffn = jnp.dot(_bf16(h), w2_ref[l], preferred_element_type=jnp.float32) + b2_ref[l]
    ffn = ffn.reshape(tb, T, Dp)

    # --- norm2(res + dropout(ffn)), dropout = identity (eval mode) --------------
    x_new = _masked_layer_norm(res + ffn, ln2g_ref[l], ln2b_ref[l], d_real)
    x_sc[...] = x_new

    # --- final Linear, fused into the last layer step ---------------------------
    @pl.when(l == n_l - 1)
    def _():
        y = jnp.dot(_bf16(x_new.reshape(tb * T, Dp)), ow_ref[...],
                    preferred_element_type=jnp.float32) + ob_ref[...]
        out_ref[...] = y.reshape(tb, T, -1)


# ----------------------------------------------------------------------------
# Wrapper
# ----------------------------------------------------------------------------
def encoder_transformer2(K, V, Q, prepped, dims, *, tb=None):
    """prepped: per-block params stacked along a leading L axis, zero-padded to
    128-lane multiples, weight matrices bf16, attention scale folded into wq/bq.
    dims = (D, hidden, dim_ff, input_v) real (unpadded) sizes."""
    X = jnp.concatenate((K, V, Q), axis=2).astype(jnp.float32)
    B, T, D = X.shape
    D_real, H_real, F_real, V_real = dims
    assert D == D_real

    (wq, bq, wk, bk, ln1g, ln1b, w1, b1, w2, b2, ln2g, ln2b, ow, ob) = prepped
    L, Dp, Hp = wq.shape
    Fp = w1.shape[2]
    Vp = ow.shape[1]

    Xp = _pad_axis(X, 2, Dp)           # zero-pad feature axis -> lane-dense

    if tb is None:
        tb = _pick_tb(B, T)
    assert B % tb == 0

    xmap = lambda b, l: (b, 0, 0)            # batch-tiled, layer-invariant
    resident3 = lambda b, l: (0, 0, 0)       # full weight stack, VMEM-resident
    resident2 = lambda b, l: (0, 0)

    in_specs = [
        pl.BlockSpec((tb, T, Dp), xmap),
        pl.BlockSpec((L, Dp, Hp), resident3),   # wq (bf16)
        pl.BlockSpec((L, 1, Hp), resident3),    # bq (f32)
        pl.BlockSpec((L, Dp, Hp), resident3),   # wk (bf16)
        pl.BlockSpec((L, 1, Hp), resident3),    # bk (f32)
        pl.BlockSpec((L, 1, Dp), resident3),    # ln1 gamma
        pl.BlockSpec((L, 1, Dp), resident3),    # ln1 beta
        pl.BlockSpec((L, Dp, Fp), resident3),   # w1 (bf16)
        pl.BlockSpec((L, 1, Fp), resident3),    # b1 (f32)
        pl.BlockSpec((L, Fp, Dp), resident3),   # w2 (bf16)
        pl.BlockSpec((L, 1, Dp), resident3),    # b2 (f32)
        pl.BlockSpec((L, 1, Dp), resident3),    # ln2 gamma
        pl.BlockSpec((L, 1, Dp), resident3),    # ln2 beta
        pl.BlockSpec((Dp, Vp), resident2),      # out_w (bf16)
        pl.BlockSpec((1, Vp), resident2),       # out_b (f32)
    ]
    out_specs = (
        pl.BlockSpec((tb, T, Vp), xmap),
        pl.BlockSpec((None, tb, T, T), lambda b, l: (l, b, 0, 0)),
    )
    out_shape = (
        jax.ShapeDtypeStruct((B, T, Vp), jnp.float32),
        jax.ShapeDtypeStruct((L, B, T, T), jnp.bfloat16),
    )

    out_p, attnw = pl.pallas_call(
        partial(_fused_kernel, d_real=D_real),
        out_shape=out_shape,
        grid_spec=pltpu.PrefetchScalarGridSpec(
            num_scalar_prefetch=0,
            grid=(B // tb, L),
            in_specs=in_specs,
            out_specs=out_specs,
            scratch_shapes=[pltpu.VMEM((tb, T, Dp), jnp.float32)],
        ),
        compiler_params=pltpu.CompilerParams(
            dimension_semantics=("parallel", "arbitrary"),
            vmem_limit_bytes=_vmem_limit(),
        ),
    )(Xp, wq, bq, wk, bk, ln1g, ln1b, w1, b1, w2, b2, ln2g, ln2b, ow, ob)

    # Slice the lane-padded output back to the real output width; return the
    # stacked attention-weight array (no per-layer wrapper slicing).
    return out_p[:, :, :V_real], attnw


# ----------------------------------------------------------------------------
# Parameters (PyTorch nn.Linear-style init) + prep (stack, fold scale, pad, bf16)
# ----------------------------------------------------------------------------
def _linear_params(key, fan_in, fan_out):
    kw, kb = jax.random.split(key)
    bound = 1.0 / math.sqrt(fan_in)
    w = jax.random.uniform(kw, (fan_in, fan_out), jnp.float32, -bound, bound)
    b = jax.random.uniform(kb, (1, fan_out), jnp.float32, -bound, bound)
    return w, b


def make_params(key, input_k, input_q, input_v, hidden, dim_ff, num_blk):
    D = input_k + input_q + input_v
    block_params = []
    for _ in range(num_blk):
        key, kq, kk, k1, k2 = jax.random.split(key, 5)
        wq, bq = _linear_params(kq, D, hidden)
        wk, bk = _linear_params(kk, D, hidden)
        w1, b1 = _linear_params(k1, D, dim_ff)
        w2, b2 = _linear_params(k2, dim_ff, D)
        ln1g = jnp.ones((1, D), jnp.float32); ln1b = jnp.zeros((1, D), jnp.float32)
        ln2g = jnp.ones((1, D), jnp.float32); ln2b = jnp.zeros((1, D), jnp.float32)
        block_params.append((wq, bq, wk, bk, ln1g, ln1b,
                             w1, b1, w2, b2, ln2g, ln2b))
    key, ko = jax.random.split(key)
    out_w, out_b = _linear_params(ko, D, input_v)
    return block_params, out_w, out_b


def prep_params(block_params, out_w, out_b, hidden, dims):
    """Stack per-block params along a leading L axis, fold 1/sqrt(hidden) into
    (wq, bq), zero-pad all feature dims to 128-lane multiples, and pre-cast
    weight matrices to bf16 (biases / LN params stay f32)."""
    D, H, F, V = dims
    Dp, Hp, Fp, Vp = _rup(D), _rup(H), _rup(F), _rup(V)
    scale = jnp.float32(1.0 / math.sqrt(hidden))

    def stack(i):
        return jnp.stack([p[i] for p in block_params], axis=0)

    def pad2(a, d1, d2):
        return _pad_axis(_pad_axis(a, 1, d1), 2, d2)

    wq = _bf16(pad2(stack(0) * scale, Dp, Hp))
    bq = pad2(stack(1) * scale, 1, Hp)
    wk = _bf16(pad2(stack(2), Dp, Hp))
    bk = pad2(stack(3), 1, Hp)
    ln1g = pad2(stack(4), 1, Dp)
    ln1b = pad2(stack(5), 1, Dp)
    w1 = _bf16(pad2(stack(6), Dp, Fp))
    b1 = pad2(stack(7), 1, Fp)
    w2 = _bf16(pad2(stack(8), Fp, Dp))
    b2 = pad2(stack(9), 1, Dp)
    ln2g = pad2(stack(10), 1, Dp)
    ln2b = pad2(stack(11), 1, Dp)
    ow = _bf16(_pad_axis(_pad_axis(out_w, 0, Dp), 1, Vp))
    ob = _pad_axis(out_b, 1, Vp)
    return (wq, bq, wk, bk, ln1g, ln1b, w1, b1, w2, b2, ln2g, ln2b, ow, ob)


# ----------------------------------------------------------------------------
# Pure-JAX reference (same math & same bf16 matmul precision) for correctness
# ----------------------------------------------------------------------------
def _ref_forward(X, prepped, dims):
    D, H, F, V = dims
    (wq, bq, wk, bk, g1, be1, w1, b1, w2, b2, g2, be2, ow, ob) = prepped
    L = wq.shape[0]
    attn = []
    for l in range(L):
        qh = jnp.einsum('btd,dh->bth', _bf16(X), wq[l, :D, :H],
                        preferred_element_type=jnp.float32) + bq[l, :, :H]
        kh = jnp.einsum('btd,dh->bth', _bf16(X), wk[l, :D, :H],
                        preferred_element_type=jnp.float32) + bk[l, :, :H]
        s = jnp.einsum('bth,bsh->bts', _bf16(qh), _bf16(kh),
                       preferred_element_type=jnp.float32)
        w = jax.nn.softmax(s, axis=-1)
        attn.append(w)
        a = jnp.einsum('bts,bsd->btd', _bf16(w), _bf16(X),
                       preferred_element_type=jnp.float32)
        X = _masked_layer_norm(X + a, g1[l, :, :D], be1[l, :, :D], D)
        h = jnp.maximum(
            jnp.einsum('btd,df->btf', _bf16(X), w1[l, :D, :F],
                       preferred_element_type=jnp.float32) + b1[l, :, :F], 0.0)
        ffn = jnp.einsum('btf,fd->btd', _bf16(h), w2[l, :F, :D],
                         preferred_element_type=jnp.float32) + b2[l, :, :D]
        X = _masked_layer_norm(X + ffn, g2[l, :, :D], be2[l, :, :D], D)
    out = jnp.einsum('btd,dv->btv', _bf16(X), ow[:D, :V],
                     preferred_element_type=jnp.float32) + ob[:, :V]
    return out, jnp.stack(attn, axis=0)


# ----------------------------------------------------------------------------
if __name__ == "__main__":
    key = jax.random.PRNGKey(0)
    B, T = 2, 8
    input_k = input_q = input_v = 4
    hidden, dim_ff, num_blk = 16, 32, 2
    D = input_k + input_q + input_v
    dims = (D, hidden, dim_ff, input_v)

    kK, kV, kQ, kP = jax.random.split(key, 4)
    K = jax.random.normal(kK, (B, T, input_k), jnp.float32)
    V = jax.random.normal(kV, (B, T, input_v), jnp.float32)
    Q = jax.random.normal(kQ, (B, T, input_q), jnp.float32)

    block_params, out_w, out_b = make_params(kP, input_k, input_q, input_v,
                                             hidden, dim_ff, num_blk)
    prepped = prep_params(block_params, out_w, out_b, hidden, dims)

    out, attnw = encoder_transformer2(K, V, Q, prepped, dims)
    out = jax.block_until_ready(out)
    attnw = jax.block_until_ready(attnw)

    ref_out, ref_attn = _ref_forward(jnp.concatenate((K, V, Q), axis=2),
                                     prepped, dims)

    assert out.shape == (B, T, input_v)
    assert attnw.shape == (num_blk, B, T, T)
    assert jnp.allclose(out, ref_out, atol=1e-2, rtol=1e-2), "output mismatch"
    assert jnp.allclose(attnw.astype(jnp.float32), ref_attn,
                        atol=2e-2, rtol=2e-2), "attention-weight mismatch"

    print("KERNEL_OK")
</pallas_src>

<mosaic_0001>
module attributes {stable_mosaic.version = 11 : i64} {
  func.func @_fused_kernel(%arg0: i32, %arg1: i32, %arg2: memref<1x8x128xf32, #tpu.memory_space<vmem>>, %arg3: memref<2x128x128xbf16, #tpu.memory_space<vmem>>, %arg4: memref<2x1x128xf32, #tpu.memory_space<vmem>>, %arg5: memref<2x128x128xbf16, #tpu.memory_space<vmem>>, %arg6: memref<2x1x128xf32, #tpu.memory_space<vmem>>, %arg7: memref<2x1x128xf32, #tpu.memory_space<vmem>>, %arg8: memref<2x1x128xf32, #tpu.memory_space<vmem>>, %arg9: memref<2x128x128xbf16, #tpu.memory_space<vmem>>, %arg10: memref<2x1x128xf32, #tpu.memory_space<vmem>>, %arg11: memref<2x128x128xbf16, #tpu.memory_space<vmem>>, %arg12: memref<2x1x128xf32, #tpu.memory_space<vmem>>, %arg13: memref<2x1x128xf32, #tpu.memory_space<vmem>>, %arg14: memref<2x1x128xf32, #tpu.memory_space<vmem>>, %arg15: memref<128x128xbf16, #tpu.memory_space<vmem>>, %arg16: memref<1x128xf32, #tpu.memory_space<vmem>>, %arg17: memref<1x8x128xf32, #tpu.memory_space<vmem>>, %arg18: memref<1x1x8x8xbf16, #tpu.memory_space<vmem>>, %arg19: memref<1x8x128xf32, #tpu.memory_space<vmem>>) attributes {dimension_semantics = [#tpu.dimension_semantics<parallel>, #tpu.dimension_semantics<arbitrary>], iteration_bounds = array<i64: 2, 2>, scalar_prefetch = 0 : i64, scratch_operands = 1 : i64, tpu.core_type = #tpu.core_type<tc>, window_params = [{transform_indices = @transform_0, window_bounds = array<i64: 1, 8, 128>}, {pipeline_mode = #tpu.pipeline_mode<synchronous>, transform_indices = @transform_1, window_bounds = array<i64: 2, 128, 128>}, {pipeline_mode = #tpu.pipeline_mode<synchronous>, transform_indices = @transform_2, window_bounds = array<i64: 2, 1, 128>}, {pipeline_mode = #tpu.pipeline_mode<synchronous>, transform_indices = @transform_3, window_bounds = array<i64: 2, 128, 128>}, {pipeline_mode = #tpu.pipeline_mode<synchronous>, transform_indices = @transform_4, window_bounds = array<i64: 2, 1, 128>}, {pipeline_mode = #tpu.pipeline_mode<synchronous>, transform_indices = @transform_5, window_bounds = array<i64: 2, 1, 128>}, {pipeline_mode = #tpu.pipeline_mode<synchronous>, transform_indices = @transform_6, window_bounds = array<i64: 2, 1, 128>}, {pipeline_mode = #tpu.pipeline_mode<synchronous>, transform_indices = @transform_7, window_bounds = array<i64: 2, 128, 128>}, {pipeline_mode = #tpu.pipeline_mode<synchronous>, transform_indices = @transform_8, window_bounds = array<i64: 2, 1, 128>}, {pipeline_mode = #tpu.pipeline_mode<synchronous>, transform_indices = @transform_9, window_bounds = array<i64: 2, 128, 128>}, {pipeline_mode = #tpu.pipeline_mode<synchronous>, transform_indices = @transform_10, window_bounds = array<i64: 2, 1, 128>}, {pipeline_mode = #tpu.pipeline_mode<synchronous>, transform_indices = @transform_11, window_bounds = array<i64: 2, 1, 128>}, {pipeline_mode = #tpu.pipeline_mode<synchronous>, transform_indices = @transform_12, window_bounds = array<i64: 2, 1, 128>}, {pipeline_mode = #tpu.pipeline_mode<synchronous>, transform_indices = @transform_13, window_bounds = array<i64: 128, 128>}, {pipeline_mode = #tpu.pipeline_mode<synchronous>, transform_indices = @transform_14, window_bounds = array<i64: 1, 128>}, {transform_indices = @transform_15, window_bounds = array<i64: 1, 8, 128>}, {transform_indices = @transform_16, window_bounds = array<i64: 1, 1, 8, 8>}]} {
    %c0_i32 = arith.constant 0 : i32
    %0 = arith.cmpi eq, %arg1, %c0_i32 : i32
    %1 = arith.extui %0 : i1 to i32
    %c0_i32_0 = arith.constant 0 : i32
    %2 = arith.cmpi ne, %1, %c0_i32_0 : i32
    scf.if %2 {
      %c0_56 = arith.constant 0 : index
      %c0_57 = arith.constant 0 : index
      %c0_58 = arith.constant 0 : index
      %140 = vector.load %arg2[%c0_56, %c0_57, %c0_58] : memref<1x8x128xf32, #tpu.memory_space<vmem>>, vector<1x8x128xf32>
      %c0_59 = arith.constant 0 : index
      %c0_60 = arith.constant 0 : index
      %c0_61 = arith.constant 0 : index
      %141 = vector.load %arg19[%c0_59, %c0_60, %c0_61] : memref<1x8x128xf32, #tpu.memory_space<vmem>>, vector<1x8x128xf32>
      tpu.vector_store %arg19[%c0_59, %c0_60, %c0_61], %140 {strides = array<i32>} : memref<1x8x128xf32, #tpu.memory_space<vmem>>, vector<1x8x128xf32>,
    } else {
    }
    %c0 = arith.constant 0 : index
    %c0_1 = arith.constant 0 : index
    %c0_2 = arith.constant 0 : index
    %3 = vector.load %arg19[%c0, %c0_1, %c0_2] : memref<1x8x128xf32, #tpu.memory_space<vmem>>, vector<1x8x128xf32>
    %4 = vector.shape_cast %3 : vector<1x8x128xf32> to vector<8x128xf32>
    %5 = arith.truncf %4 : vector<8x128xf32> to vector<8x128xbf16>
    %6 = arith.index_cast %arg1 : i32 to index
    %c0_3 = arith.constant 0 : index
    %c0_4 = arith.constant 0 : index
    %7 = vector.load %arg3[%6, %c0_3, %c0_4] : memref<2x128x128xbf16, #tpu.memory_space<vmem>>, vector<1x128x128xbf16>
    %8 = vector.shape_cast %7 : vector<1x128x128xbf16> to vector<128x128xbf16>
    %cst = arith.constant dense<0.000000e+00> : vector<8x128xf32>
    %9 = tpu.matmul %5, %8, %cst {dimension_numbers = #tpu.dot_dimension_numbers<[1], [0], [0], [1], [0, 0, 1, 1], [], []>} : vector<8x128xbf16>, vector<128x128xbf16>, vector<8x128xf32> -> vector<8x128xf32>
    %10 = arith.index_cast %arg1 : i32 to index
    %c0_5 = arith.constant 0 : index
    %c0_6 = arith.constant 0 : index
    %11 = vector.load %arg4[%10, %c0_5, %c0_6] : memref<2x1x128xf32, #tpu.memory_space<vmem>>, vector<1x1x128xf32>
    %12 = vector.shape_cast %11 : vector<1x1x128xf32> to vector<1x128xf32>
    %13 = vector.broadcast %12 : vector<1x128xf32> to vector<8x128xf32>
    %14 = arith.addf %9, %13 : vector<8x128xf32>
    %15 = arith.index_cast %arg1 : i32 to index
    %c0_7 = arith.constant 0 : index
    %c0_8 = arith.constant 0 : index
    %16 = vector.load %arg5[%15, %c0_7, %c0_8] : memref<2x128x128xbf16, #tpu.memory_space<vmem>>, vector<1x128x128xbf16>
    %17 = vector.shape_cast %16 : vector<1x128x128xbf16> to vector<128x128xbf16>
    %cst_9 = arith.constant dense<0.000000e+00> : vector<8x128xf32>
    %18 = tpu.matmul %5, %17, %cst_9 {dimension_numbers = #tpu.dot_dimension_numbers<[1], [0], [0], [1], [0, 0, 1, 1], [], []>} : vector<8x128xbf16>, vector<128x128xbf16>, vector<8x128xf32> -> vector<8x128xf32>
    %19 = arith.index_cast %arg1 : i32 to index
    %c0_10 = arith.constant 0 : index
    %c0_11 = arith.constant 0 : index
    %20 = vector.load %arg6[%19, %c0_10, %c0_11] : memref<2x1x128xf32, #tpu.memory_space<vmem>>, vector<1x1x128xf32>
    %21 = vector.shape_cast %20 : vector<1x1x128xf32> to vector<1x128xf32>
    %22 = vector.broadcast %21 : vector<1x128xf32> to vector<8x128xf32>
    %23 = arith.addf %18, %22 : vector<8x128xf32>
    %24 = arith.truncf %14 : vector<8x128xf32> to vector<8x128xbf16>
    %25 = arith.truncf %23 : vector<8x128xf32> to vector<8x128xbf16>
    %cst_12 = arith.constant dense<0.000000e+00> : vector<8x8xf32>
    %26 = tpu.matmul %24, %25, %cst_12 {dimension_numbers = #tpu.dot_dimension_numbers<[1], [1], [0], [0], [0, 0, 1, 0], [], []>} : vector<8x128xbf16>, vector<8x128xbf16>, vector<8x8xf32> -> vector<8x8xf32>
    %cst_13 = arith.constant dense<0xFF800000> : vector<8xf32>
    %27 = vector.multi_reduction <maximumf>, %26, %cst_13 [1] : vector<8x8xf32> to vector<8xf32>
    %28 = vector.shape_cast %27 : vector<8xf32> to vector<8x1xf32>
    %29 = vector.broadcast %28 : vector<8x1xf32> to vector<8x8xf32>
    %30 = arith.subf %26, %29 : vector<8x8xf32>
    %31 = math.exp %30 : vector<8x8xf32>
    %cst_14 = arith.constant dense<0.000000e+00> : vector<8xf32>
    %32 = vector.multi_reduction <add>, %31, %cst_14 [1] : vector<8x8xf32> to vector<8xf32>
    %33 = vector.shape_cast %32 : vector<8xf32> to vector<8x1xf32>
    %34 = vector.broadcast %33 : vector<8x1xf32> to vector<8x8xf32>
    %35 = arith.divf %31, %34 : vector<8x8xf32>
    %36 = vector.shape_cast %35 : vector<8x8xf32> to vector<1x8x8xf32>
    %37 = arith.truncf %36 : vector<1x8x8xf32> to vector<1x8x8xbf16>
    %c0_15 = arith.constant 0 : index
    %c0_16 = arith.constant 0 : index
    %c0_17 = arith.constant 0 : index
    %c0_18 = arith.constant 0 : index
    %38 = vector.load %arg18[%c0_15, %c0_16, %c0_17, %c0_18] : memref<1x1x8x8xbf16, #tpu.memory_space<vmem>>, vector<1x1x8x8xbf16>
    %39 = vector.shape_cast %38 : vector<1x1x8x8xbf16> to vector<1x8x8xbf16>
    %40 = vector.shape_cast %37 : vector<1x8x8xbf16> to vector<1x1x8x8xbf16>
    tpu.vector_store %arg18[%c0_15, %c0_16, %c0_17, %c0_18], %40 {strides = array<i32>} : memref<1x1x8x8xbf16, #tpu.memory_space<vmem>>, vector<1x1x8x8xbf16>,
    %41 = arith.truncf %35 : vector<8x8xf32> to vector<8x8xbf16>
    %cst_19 = arith.constant dense<0.000000e+00> : vector<8x128xf32>
    %42 = tpu.matmul %41, %5, %cst_19 {dimension_numbers = #tpu.dot_dimension_numbers<[1], [0], [0], [1], [0, 0, 1, 1], [], []>} : vector<8x8xbf16>, vector<8x128xbf16>, vector<8x128xf32> -> vector<8x128xf32>
    %43 = vector.shape_cast %42 : vector<8x128xf32> to vector<1x8x128xf32>
    %44 = arith.addf %3, %43 : vector<1x8x128xf32>
    %45 = arith.index_cast %arg1 : i32 to index
    %c0_20 = arith.constant 0 : index
    %c0_21 = arith.constant 0 : index
    %46 = vector.load %arg7[%45, %c0_20, %c0_21] : memref<2x1x128xf32, #tpu.memory_space<vmem>>, vector<1x1x128xf32>
    %47 = vector.shape_cast %46 : vector<1x1x128xf32> to vector<1x128xf32>
    %48 = arith.index_cast %arg1 : i32 to index
    %c0_22 = arith.constant 0 : index
    %c0_23 = arith.constant 0 : index
    %49 = vector.load %arg8[%48, %c0_22, %c0_23] : memref<2x1x128xf32, #tpu.memory_space<vmem>>, vector<1x1x128xf32>
    %50 = vector.shape_cast %49 : vector<1x1x128xf32> to vector<1x128xf32>
    %cst_24 = arith.constant dense<0.000000e+00> : vector<1x8xf32>
    %51 = vector.multi_reduction <add>, %44, %cst_24 [2] : vector<1x8x128xf32> to vector<1x8xf32>
    %52 = vector.shape_cast %51 : vector<1x8xf32> to vector<1x8x1xf32>
    %cst_25 = arith.constant 0.0833333358 : f32
    %53 = vector.broadcast %cst_25 : f32 to vector<1x8x1xf32>
    %54 = arith.mulf %52, %53 : vector<1x8x1xf32>
    %55 = vector.broadcast %54 : vector<1x8x1xf32> to vector<1x8x128xf32>
    %56 = arith.subf %44, %55 : vector<1x8x128xf32>
    %57 = tpu.iota {dimensions = array<i32: 2>} : vector<1x8x128xi32>
    %c12_i32 = arith.constant 12 : i32
    %58 = vector.broadcast %c12_i32 : i32 to vector<1x8x128xi32>
    %59 = arith.cmpi slt, %57, %58 : vector<1x8x128xi32>
    %cst_26 = arith.constant 0.000000e+00 : f32
    %60 = vector.broadcast %cst_26 : f32 to vector<1x8x128xf32>
    %61 = arith.select %59, %56, %60 : vector<1x8x128xi1>, vector<1x8x128xf32>
    %62 = arith.mulf %61, %61 : vector<1x8x128xf32>
    %cst_27 = arith.constant dense<0.000000e+00> : vector<1x8xf32>
    %63 = vector.multi_reduction <add>, %62, %cst_27 [2] : vector<1x8x128xf32> to vector<1x8xf32>
    %64 = vector.shape_cast %63 : vector<1x8xf32> to vector<1x8x1xf32>
    %cst_28 = arith.constant 0.0833333358 : f32
    %65 = vector.broadcast %cst_28 : f32 to vector<1x8x1xf32>
    %66 = arith.mulf %64, %65 : vector<1x8x1xf32>
    %cst_29 = arith.constant 9.99999974E-6 : f32
    %67 = vector.broadcast %cst_29 : f32 to vector<1x8x1xf32>
    %68 = arith.addf %66, %67 : vector<1x8x1xf32>
    %69 = math.rsqrt %68 : vector<1x8x1xf32>
    %70 = vector.broadcast %69 : vector<1x8x1xf32> to vector<1x8x128xf32>
    %71 = arith.mulf %61, %70 : vector<1x8x128xf32>
    %72 = vector.shape_cast %47 : vector<1x128xf32> to vector<1x1x128xf32>
    %73 = vector.broadcast %72 : vector<1x1x128xf32> to vector<1x8x128xf32>
    %74 = arith.mulf %71, %73 : vector<1x8x128xf32>
    %75 = vector.shape_cast %50 : vector<1x128xf32> to vector<1x1x128xf32>
    %76 = vector.broadcast %75 : vector<1x1x128xf32> to vector<1x8x128xf32>
    %77 = arith.addf %74, %76 : vector<1x8x128xf32>
    %78 = vector.shape_cast %77 : vector<1x8x128xf32> to vector<8x128xf32>
    %79 = arith.truncf %78 : vector<8x128xf32> to vector<8x128xbf16>
    %80 = arith.index_cast %arg1 : i32 to index
    %c0_30 = arith.constant 0 : index
    %c0_31 = arith.constant 0 : index
    %81 = vector.load %arg9[%80, %c0_30, %c0_31] : memref<2x128x128xbf16, #tpu.memory_space<vmem>>, vector<1x128x128xbf16>
    %82 = vector.shape_cast %81 : vector<1x128x128xbf16> to vector<128x128xbf16>
    %cst_32 = arith.constant dense<0.000000e+00> : vector<8x128xf32>
    %83 = tpu.matmul %79, %82, %cst_32 {dimension_numbers = #tpu.dot_dimension_numbers<[1], [0], [0], [1], [0, 0, 1, 1], [], []>} : vector<8x128xbf16>, vector<128x128xbf16>, vector<8x128xf32> -> vector<8x128xf32>
    %84 = arith.index_cast %arg1 : i32 to index
    %c0_33 = arith.constant 0 : index
    %c0_34 = arith.constant 0 : index
    %85 = vector.load %arg10[%84, %c0_33, %c0_34] : memref<2x1x128xf32, #tpu.memory_space<vmem>>, vector<1x1x128xf32>
    %86 = vector.shape_cast %85 : vector<1x1x128xf32> to vector<1x128xf32>
    %87 = vector.broadcast %86 : vector<1x128xf32> to vector<8x128xf32>
    %88 = arith.addf %83, %87 : vector<8x128xf32>
    %cst_35 = arith.constant 0.000000e+00 : f32
    %89 = vector.broadcast %cst_35 : f32 to vector<8x128xf32>
    %90 = arith.maximumf %88, %89 : vector<8x128xf32>
    %91 = arith.truncf %90 : vector<8x128xf32> to vector<8x128xbf16>
    %92 = arith.index_cast %arg1 : i32 to index
    %c0_36 = arith.constant 0 : index
    %c0_37 = arith.constant 0 : index
    %93 = vector.load %arg11[%92, %c0_36, %c0_37] : memref<2x128x128xbf16, #tpu.memory_space<vmem>>, vector<1x128x128xbf16>
    %94 = vector.shape_cast %93 : vector<1x128x128xbf16> to vector<128x128xbf16>
    %cst_38 = arith.constant dense<0.000000e+00> : vector<8x128xf32>
    %95 = tpu.matmul %91, %94, %cst_38 {dimension_numbers = #tpu.dot_dimension_numbers<[1], [0], [0], [1], [0, 0, 1, 1], [], []>} : vector<8x128xbf16>, vector<128x128xbf16>, vector<8x128xf32> -> vector<8x128xf32>
    %96 = arith.index_cast %arg1 : i32 to index
    %c0_39 = arith.constant 0 : index
    %c0_40 = arith.constant 0 : index
    %97 = vector.load %arg12[%96, %c0_39, %c0_40] : memref<2x1x128xf32, #tpu.memory_space<vmem>>, vector<1x1x128xf32>
    %98 = vector.shape_cast %97 : vector<1x1x128xf32> to vector<1x128xf32>
    %99 = vector.broadcast %98 : vector<1x128xf32> to vector<8x128xf32>
    %100 = arith.addf %95, %99 : vector<8x128xf32>
    %101 = vector.shape_cast %100 : vector<8x128xf32> to vector<1x8x128xf32>
    %102 = arith.addf %77, %101 : vector<1x8x128xf32>
    %103 = arith.index_cast %arg1 : i32 to index
    %c0_41 = arith.constant 0 : index
    %c0_42 = arith.constant 0 : index
    %104 = vector.load %arg13[%103, %c0_41, %c0_42] : memref<2x1x128xf32, #tpu.memory_space<vmem>>, vector<1x1x128xf32>
    %105 = vector.shape_cast %104 : vector<1x1x128xf32> to vector<1x128xf32>
    %106 = arith.index_cast %arg1 : i32 to index
    %c0_43 = arith.constant 0 : index
    %c0_44 = arith.constant 0 : index
    %107 = vector.load %arg14[%106, %c0_43, %c0_44] : memref<2x1x128xf32, #tpu.memory_space<vmem>>, vector<1x1x128xf32>
    %108 = vector.shape_cast %107 : vector<1x1x128xf32> to vector<1x128xf32>
    %cst_45 = arith.constant dense<0.000000e+00> : vector<1x8xf32>
    %109 = vector.multi_reduction <add>, %102, %cst_45 [2] : vector<1x8x128xf32> to vector<1x8xf32>
    %110 = vector.shape_cast %109 : vector<1x8xf32> to vector<1x8x1xf32>
    %cst_46 = arith.constant 0.0833333358 : f32
    %111 = vector.broadcast %cst_46 : f32 to vector<1x8x1xf32>
    %112 = arith.mulf %110, %111 : vector<1x8x1xf32>
    %113 = vector.broadcast %112 : vector<1x8x1xf32> to vector<1x8x128xf32>
    %114 = arith.subf %102, %113 : vector<1x8x128xf32>
    %115 = tpu.iota {dimensions = array<i32: 2>} : vector<1x8x128xi32>
    %c12_i32_47 = arith.constant 12 : i32
    %116 = vector.broadcast %c12_i32_47 : i32 to vector<1x8x128xi32>
    %117 = arith.cmpi slt, %115, %116 : vector<1x8x128xi32>
    %cst_48 = arith.constant 0.000000e+00 : f32
    %118 = vector.broadcast %cst_48 : f32 to vector<1x8x128xf32>
    %119 = arith.select %117, %114, %118 : vector<1x8x128xi1>, vector<1x8x128xf32>
    %120 = arith.mulf %119, %119 : vector<1x8x128xf32>
    %cst_49 = arith.constant dense<0.000000e+00> : vector<1x8xf32>
    %121 = vector.multi_reduction <add>, %120, %cst_49 [2] : vector<1x8x128xf32> to vector<1x8xf32>
    %122 = vector.shape_cast %121 : vector<1x8xf32> to vector<1x8x1xf32>
    %cst_50 = arith.constant 0.0833333358 : f32
    %123 = vector.broadcast %cst_50 : f32 to vector<1x8x1xf32>
    %124 = arith.mulf %122, %123 : vector<1x8x1xf32>
    %cst_51 = arith.constant 9.99999974E-6 : f32
    %125 = vector.broadcast %cst_51 : f32 to vector<1x8x1xf32>
    %126 = arith.addf %124, %125 : vector<1x8x1xf32>
    %127 = math.rsqrt %126 : vector<1x8x1xf32>
    %128 = vector.broadcast %127 : vector<1x8x1xf32> to vector<1x8x128xf32>
    %129 = arith.mulf %119, %128 : vector<1x8x128xf32>
    %130 = vector.shape_cast %105 : vector<1x128xf32> to vector<1x1x128xf32>
    %131 = vector.broadcast %130 : vector<1x1x128xf32> to vector<1x8x128xf32>
    %132 = arith.mulf %129, %131 : vector<1x8x128xf32>
    %133 = vector.shape_cast %108 : vector<1x128xf32> to vector<1x1x128xf32>
    %134 = vector.broadcast %133 : vector<1x1x128xf32> to vector<1x8x128xf32>
    %135 = arith.addf %132, %134 : vector<1x8x128xf32>
    %c0_52 = arith.constant 0 : index
    %c0_53 = arith.constant 0 : index
    %c0_54 = arith.constant 0 : index
    %136 = vector.load %arg19[%c0_52, %c0_53, %c0_54] : memref<1x8x128xf32, #tpu.memory_space<vmem>>, vector<1x8x128xf32>
    tpu.vector_store %arg19[%c0_52, %c0_53, %c0_54], %135 {strides = array<i32>} : memref<1x8x128xf32, #tpu.memory_space<vmem>>, vector<1x8x128xf32>,
    %c1_i32 = arith.constant 1 : i32
    %137 = arith.cmpi eq, %arg1, %c1_i32 : i32
    %138 = arith.extui %137 : i1 to i32
    %c0_i32_55 = arith.constant 0 : i32
    %139 = arith.cmpi ne, %138, %c0_i32_55 : i32
    scf.if %139 {
      %140 = vector.shape_cast %135 : vector<1x8x128xf32> to vector<8x128xf32>
      %141 = arith.truncf %140 : vector<8x128xf32> to vector<8x128xbf16>
      %c0_56 = arith.constant 0 : index
      %c0_57 = arith.constant 0 : index
      %142 = vector.load %arg15[%c0_56, %c0_57] : memref<128x128xbf16, #tpu.memory_space<vmem>>, vector<128x128xbf16>
      %cst_58 = arith.constant dense<0.000000e+00> : vector<8x128xf32>
      %143 = tpu.matmul %141, %142, %cst_58 {dimension_numbers = #tpu.dot_dimension_numbers<[1], [0], [0], [1], [0, 0, 1, 1], [], []>} : vector<8x128xbf16>, vector<128x128xbf16>, vector<8x128xf32> -> vector<8x128xf32>
      %c0_59 = arith.constant 0 : index
      %c0_60 = arith.constant 0 : index
      %144 = vector.load %arg16[%c0_59, %c0_60] : memref<1x128xf32, #tpu.memory_space<vmem>>, vector<1x128xf32>
      %145 = vector.broadcast %144 : vector<1x128xf32> to vector<8x128xf32>
      %146 = arith.addf %143, %145 : vector<8x128xf32>
      %147 = vector.shape_cast %146 : vector<8x128xf32> to vector<1x8x128xf32>
      %c0_61 = arith.constant 0 : index
      %c0_62 = arith.constant 0 : index
      %c0_63 = arith.constant 0 : index
      %148 = vector.load %arg17[%c0_61, %c0_62, %c0_63] : memref<1x8x128xf32, #tpu.memory_space<vmem>>, vector<1x8x128xf32>
      tpu.vector_store %arg17[%c0_61, %c0_62, %c0_63], %147 {strides = array<i32>} : memref<1x8x128xf32, #tpu.memory_space<vmem>>, vector<1x8x128xf32>,
    } else {
    }
    return
  }
  func.func @transform_0(%arg0: i32, %arg1: i32) -> (i32, i32, i32) {
    %c0_i32 = arith.constant 0 : i32
    %c0_i32_0 = arith.constant 0 : i32
    %c0_i32_1 = arith.constant 0 : i32
    return %arg0, %c0_i32, %c0_i32_0 : i32, i32, i32
  }
  func.func @transform_1(%arg0: i32, %arg1: i32) -> (i32, i32, i32) {
    %c0_i32 = arith.constant 0 : i32
    %c0_i32_0 = arith.constant 0 : i32
    %c0_i32_1 = arith.constant 0 : i32
    %c0_i32_2 = arith.constant 0 : i32
    return %c0_i32, %c0_i32_0, %c0_i32_1 : i32, i32, i32
  }
  func.func @transform_2(%arg0: i32, %arg1: i32) -> (i32, i32, i32) {
    %c0_i32 = arith.constant 0 : i32
    %c0_i32_0 = arith.constant 0 : i32
    %c0_i32_1 = arith.constant 0 : i32
    %c0_i32_2 = arith.constant 0 : i32
    return %c0_i32, %c0_i32_0, %c0_i32_1 : i32, i32, i32
  }
  func.func @transform_3(%arg0: i32, %arg1: i32) -> (i32, i32, i32) {
    %c0_i32 = arith.constant 0 : i32
    %c0_i32_0 = arith.constant 0 : i32
    %c0_i32_1 = arith.constant 0 : i32
    %c0_i32_2 = arith.constant 0 : i32
    return %c0_i32, %c0_i32_0, %c0_i32_1 : i32, i32, i32
  }
  func.func @transform_4(%arg0: i32, %arg1: i32) -> (i32, i32, i32) {
    %c0_i32 = arith.constant 0 : i32
    %c0_i32_0 = arith.constant 0 : i32
    %c0_i32_1 = arith.constant 0 : i32
    %c0_i32_2 = arith.constant 0 : i32
    return %c0_i32, %c0_i32_0, %c0_i32_1 : i32, i32, i32
  }
  func.func @transform_5(%arg0: i32, %arg1: i32) -> (i32, i32, i32) {
    %c0_i32 = arith.constant 0 : i32
    %c0_i32_0 = arith.constant 0 : i32
    %c0_i32_1 = arith.constant 0 : i32
    %c0_i32_2 = arith.constant 0 : i32
    return %c0_i32, %c0_i32_0, %c0_i32_1 : i32, i32, i32
  }
  func.func @transform_6(%arg0: i32, %arg1: i32) -> (i32, i32, i32) {
    %c0_i32 = arith.constant 0 : i32
    %c0_i32_0 = arith.constant 0 : i32
    %c0_i32_1 = arith.constant 0 : i32
    %c0_i32_2 = arith.constant 0 : i32
    return %c0_i32, %c0_i32_0, %c0_i32_1 : i32, i32, i32
  }
  func.func @transform_7(%arg0: i32, %arg1: i32) -> (i32, i32, i32) {
    %c0_i32 = arith.constant 0 : i32
    %c0_i32_0 = arith.constant 0 : i32
    %c0_i32_1 = arith.constant 0 : i32
    %c0_i32_2 = arith.constant 0 : i32
    return %c0_i32, %c0_i32_0, %c0_i32_1 : i32, i32, i32
  }
  func.func @transform_8(%arg0: i32, %arg1: i32) -> (i32, i32, i32) {
    %c0_i32 = arith.constant 0 : i32
    %c0_i32_0 = arith.constant 0 : i32
    %c0_i32_1 = arith.constant 0 : i32
    %c0_i32_2 = arith.constant 0 : i32
    return %c0_i32, %c0_i32_0, %c0_i32_1 : i32, i32, i32
  }
  func.func @transform_9(%arg0: i32, %arg1: i32) -> (i32, i32, i32) {
    %c0_i32 = arith.constant 0 : i32
    %c0_i32_0 = arith.constant 0 : i32
    %c0_i32_1 = arith.constant 0 : i32
    %c0_i32_2 = arith.constant 0 : i32
    return %c0_i32, %c0_i32_0, %c0_i32_1 : i32, i32, i32
  }
  func.func @transform_10(%arg0: i32, %arg1: i32) -> (i32, i32, i32) {
    %c0_i32 = arith.constant 0 : i32
    %c0_i32_0 = arith.constant 0 : i32
    %c0_i32_1 = arith.constant 0 : i32
    %c0_i32_2 = arith.constant 0 : i32
    return %c0_i32, %c0_i32_0, %c0_i32_1 : i32, i32, i32
  }
  func.func @transform_11(%arg0: i32, %arg1: i32) -> (i32, i32, i32) {
    %c0_i32 = arith.constant 0 : i32
    %c0_i32_0 = arith.constant 0 : i32
    %c0_i32_1 = arith.constant 0 : i32
    %c0_i32_2 = arith.constant 0 : i32
    return %c0_i32, %c0_i32_0, %c0_i32_1 : i32, i32, i32
  }
  func.func @transform_12(%arg0: i32, %arg1: i32) -> (i32, i32, i32) {
    %c0_i32 = arith.constant 0 : i32
    %c0_i32_0 = arith.constant 0 : i32
    %c0_i32_1 = arith.constant 0 : i32
    %c0_i32_2 = arith.constant 0 : i32
    return %c0_i32, %c0_i32_0, %c0_i32_1 : i32, i32, i32
  }
  func.func @transform_13(%arg0: i32, %arg1: i32) -> (i32, i32) {
    %c0_i32 = arith.constant 0 : i32
    %c0_i32_0 = arith.constant 0 : i32
    %c0_i32_1 = arith.constant 0 : i32
    return %c0_i32, %c0_i32_0 : i32, i32
  }
  func.func @transform_14(%arg0: i32, %arg1: i32) -> (i32, i32) {
    %c0_i32 = arith.constant 0 : i32
    %c0_i32_0 = arith.constant 0 : i32
    %c0_i32_1 = arith.constant 0 : i32
    return %c0_i32, %c0_i32_0 : i32, i32
  }
  func.func @transform_15(%arg0: i32, %arg1: i32) -> (i32, i32, i32) {
    %c0_i32 = arith.constant 0 : i32
    %c0_i32_0 = arith.constant 0 : i32
    %c0_i32_1 = arith.constant 0 : i32
    return %arg0, %c0_i32, %c0_i32_0 : i32, i32, i32
  }
  func.func @transform_16(%arg0: i32, %arg1: i32) -> (i32, i32, i32, i32) {
    %c0_i32 = arith.constant 0 : i32
    %c0_i32_0 = arith.constant 0 : i32
    %c0_i32_1 = arith.constant 0 : i32
    return %arg1, %arg0, %c0_i32, %c0_i32_0 : i32, i32, i32, i32
  }
}

</mosaic_0001>

<llo_original>
// kernel: tpu_custom_call.1
$region0: #{tpu_custom_call.1}
  #allocation0 [shape = 'u32[]', space=smem, size = 0x4, offset = 0x4, fixed_abs, tag = 'smem constant byte address 0x4 - core index']
  #allocation1 [shape = 'u32[144,128]{1,0:T(1,128)}', space=vmem, size = 0x12000, scoped, tag = 'internal scratch']
  #allocation2 [shape = 'f32[1,8,128]{2,1,0:T(8,128)}', space=vmem, size = 0x1000, scoped, tag = 'scratch operand']
  %s0 = inlined_call_operand.hbm [shape: f32[2,8,128], index: 0, kind: input, shape index: {}]
  %s1 = inlined_call_operand.hbm [shape: bf16[2,128,128], index: 1, kind: input, shape index: {}]
  %s2 = inlined_call_operand.vmem [shape: f32[2,1,128], index: 2, kind: input, shape index: {}]
  %s3 = inlined_call_operand.hbm [shape: bf16[2,128,128], index: 3, kind: input, shape index: {}]
  %s4 = inlined_call_operand.vmem [shape: f32[2,1,128], index: 4, kind: input, shape index: {}]
  %s5 = inlined_call_operand.vmem [shape: f32[2,1,128], index: 5, kind: input, shape index: {}]
  %s6 = inlined_call_operand.vmem [shape: f32[2,1,128], index: 6, kind: input, shape index: {}]
  %s7 = inlined_call_operand.hbm [shape: bf16[2,128,128], index: 7, kind: input, shape index: {}]
  %s8 = inlined_call_operand.vmem [shape: f32[2,1,128], index: 8, kind: input, shape index: {}]
  %s9 = inlined_call_operand.hbm [shape: bf16[2,128,128], index: 9, kind: input, shape index: {}]
  %s10 = inlined_call_operand.vmem [shape: f32[2,1,128], index: 10, kind: input, shape index: {}]
  %s11 = inlined_call_operand.vmem [shape: f32[2,1,128], index: 11, kind: input, shape index: {}]
  %s12 = inlined_call_operand.vmem [shape: f32[2,1,128], index: 12, kind: input, shape index: {}]
  %s13 = inlined_call_operand.hbm [shape: bf16[128,128], index: 13, kind: input, shape index: {}]
  %s14 = inlined_call_operand.vmem [shape: f32[1,128], index: 14, kind: input, shape index: {}]
  %s15 = inlined_call_operand.hbm [shape: f32[2,8,128], index: 15, kind: output, shape index: {0}]
  %s16 = inlined_call_operand.hbm [shape: bf16[2,2,8,8], index: 16, kind: output, shape index: {1}]
  %17 = xla_tuple %s15, %s16
  %s18 = sld [smem:[#allocation0]]
  $region133: #{tpu_custom_call.1} parent=0
    _
  %s20 = ssub.s32 1, %s18
  %s21 = scalar_select 0, %s20, %s18
  $region1: #{tpu_custom_call.1} parent=0
    #allocation3 [shape = 'u8[8192]{0}', space=vmem, size = 0x2000, scoped, tag = 'input window, operand 0']
    #allocation4 [shape = 's32[2]{0}', space=sflag, size = 0x8, scoped, tag = 'scoped memory for tpu_custom_call.1']
    #allocation5 [shape = 's32[2]{0}', space=sflag, size = 0x8, scoped, tag = 'scoped memory for tpu_custom_call.1']
    #allocation6 [shape = 'u8[65536]{0}', space=vmem, size = 0x10000, scoped, tag = 'input window, operand 1, single buffered']
    #allocation7 [shape = 's32[1]{0}', space=sflag, size = 0x4, scoped, tag = 'scoped memory for tpu_custom_call.1']
    #allocation8 [shape = 'u8[65536]{0}', space=vmem, size = 0x10000, scoped, tag = 'input window, operand 3, single buffered']
    #allocation9 [shape = 'u8[65536]{0}', space=vmem, size = 0x10000, scoped, tag = 'input window, operand 7, single buffered']
    #allocation10 [shape = 's32[1]{0}', space=sflag, size = 0x4, scoped, tag = 'scoped memory for tpu_custom_call.1']
    #allocation11 [shape = 'u8[65536]{0}', space=vmem, size = 0x10000, scoped, tag = 'input window, operand 9, single buffered']
    #allocation12 [shape = 'u8[32768]{0}', space=vmem, size = 0x8000, scoped, tag = 'input window, operand 13, single buffered']
    #allocation13 [shape = 's32[1]{0}', space=sflag, size = 0x4, scoped, tag = 'scoped memory for tpu_custom_call.1']
    #allocation14 [shape = 'u8[8192]{0}', space=vmem, size = 0x2000, scoped, tag = 'output window, operand 0']
    #allocation15 [shape = 'u8[4096]{0}', space=vmem, size = 0x1000, scoped, tag = 'output window, operand 1']
    #allocation16 [shape = 's32[2]{0}', space=sflag, size = 0x8, scoped, tag = 'scoped memory for tpu_custom_call.1']
    %22 = vsyncpa [#allocation4], 0
    %s23 = scalar_lea.sflag [#allocation4], 1
    %24 = vsyncpa %s23, 0
    %25 = vsyncpa [#allocation7], 0
    %26 = vsyncpa [#allocation10], 0
    %27 = vsyncpa [#allocation13], 0
    %28 = vsyncpa [#allocation5], 0
    %s29 = scalar_lea.sflag [#allocation5], 1
    %30 = vsyncpa %s29, 0
    %31 = vsyncpa [#allocation16], 0
    %s32 = scalar_lea.sflag [#allocation16], 1
    %33 = vsyncpa %s32, 0
    loop: start=0, step=1, limit=6
    $region2: #{tpu_custom_call.1} parent=1 // loop_pre_header
      _
    $region3: #{tpu_custom_call.1} parent=1 // loop_header
      %s35 = sphi 0, %s39
      %p36 = scmp.ge.s32.totalorder %s35, 6
      %s42 = sphi 0, %s54
      %s43 = sphi 0, %s50
      %s44 = sphi 0, %s42
      %s45 = sphi 0, %s43
      %s46 = sphi 0, %s44
      %s47 = sphi 0, %s45
      %s57 = sphi 0, %s59
      %s60 = sphi 0, %s57
      %s61 = sphi 0, %s60
      %s77 = sphi 0, %s61
      %s81 = sphi 0, %s81
      %s83 = sphi 0, %s81
      %s84 = sphi 0, %s83
      %s98 = sphi 0, %s84
      %s102 = sphi 0, %s102
      %s104 = sphi 0, %s102
      %s105 = sphi 0, %s104
      %s119 = sphi 0, %s105
      %s123 = sphi 0, %s123
      %s125 = sphi 0, %s123
      %s126 = sphi 0, %s125
      %s140 = sphi 0, %s126
      %s144 = sphi 0, %s144
      %s146 = sphi 0, %s144
      %s147 = sphi 0, %s146
      %s161 = sphi 0, %s147
      %s165 = sphi 0, %s165
      %s167 = sphi 0, %s165
      %s168 = sphi 0, %s167
      %s182 = sphi 0, %s168
      %s186 = sphi 0, %s186
      %s188 = sphi 0, %s186
      %s189 = sphi 0, %s188
      %s203 = sphi 0, %s189
      %s207 = sphi 0, %s207
      %s209 = sphi 0, %s207
      %s210 = sphi 0, %s209
      %s224 = sphi 0, %s210
      %s228 = sphi 0, %s228
      %s230 = sphi 0, %s228
      %s231 = sphi 0, %s230
      %s245 = sphi 0, %s231
      %s249 = sphi 0, %s249
      %s251 = sphi 0, %s249
      %s252 = sphi 0, %s251
      %s266 = sphi 0, %s252
      %s270 = sphi 0, %s270
      %s272 = sphi 0, %s270
      %s273 = sphi 0, %s272
      %s287 = sphi 0, %s273
      %s291 = sphi 0, %s291
      %s293 = sphi 0, %s291
      %s294 = sphi 0, %s293
      %s308 = sphi 0, %s294
      %s312 = sphi 0, %s312
      %s314 = sphi 0, %s312
      %s315 = sphi 0, %s314
      %s329 = sphi 0, %s315
      %s333 = sphi 0, %s333
      %s335 = sphi 0, %s333
      %s336 = sphi 0, %s335
      %s350 = sphi 0, %s336
      %s354 = sphi 0, %s354
      %s356 = sphi 0, %s354
      %s357 = sphi 0, %s356
      %s371 = sphi 0, %s357
      %s377 = sphi 0, %s379
      %s380 = sphi 0, %s377
      %s381 = sphi 0, %s380
      %s397 = sphi 0, %s381
      %s405 = sphi 0, %s407
      %s408 = sphi 0, %s405
      %s409 = sphi 0, %s408
      %s425 = sphi 0, %s409
    $region4: #{tpu_custom_call.1} parent=1 // loop_header_branch
      %38 = sbr.rel (%p36) target = $region8
    $region5: #{tpu_custom_call.1} parent=1 // loop_body
      %s40 = ssub.s32 %s35, 1
      %s41 = ssub.s32 %s35, 2
      %s48 = sadd.s32 1, %s43
      %p49 = scmp.ge.s32.totalorder %s48, 2
      %s50 = scalar_select %p49, 0, %s48
      %s51 = sadd.s32 1, %s42
      %s52 = scalar_select %p49, %s51, %s42
      %p53 = scmp.ge.s32.totalorder %s52, 2
      %s54 = scalar_select %p53, 0, %s52
      %s55 = ssub.s32 %s42, %s54
      %p56 = scmp.eq.s32.totalorder %s55, 0
      %s58 = sadd.s32 %s57, 1
      %s59 = scalar_select %p56, %s57, %s58
      %p62 = pneg %p56
      %p63 = scmp.eq.s32.totalorder %s35, 3
      %p64 = por %p62, %p63
      %p65 = scmp.ne.s32.totalorder %s57, %s60
      %p66 = scmp.eq.s32.totalorder %s35, 0
      %p67 = por %p65, %p66
      %p68 = scmp.ne.s32.totalorder %s57, %s60
      %p69 = scmp.eq.s32.totalorder %s40, 3
      %p70 = por %p68, %p69
      %p71 = scmp.ne.s32.totalorder %s60, %s61
      %p72 = scmp.eq.s32.totalorder %s40, 0
      %p73 = por %p71, %p72
      %p74 = scmp.ne.s32.totalorder %s60, %s61
      %p75 = scmp.eq.s32.totalorder %s41, 3
      %p76 = por %p74, %p75
      %p78 = scmp.ne.s32.totalorder %s61, %s77
      %p79 = scmp.eq.s32.totalorder %s41, 0
      %p80 = por %p78, %p79
      %s82 = sadd.s32 %s81, 1
      %p85 = scmp.eq.s32.totalorder %s35, 3
      %p86 = scmp.ne.s32.totalorder %s81, %s83
      %p87 = scmp.eq.s32.totalorder %s35, 0
      %p88 = por %p86, %p87
      %p89 = scmp.ne.s32.totalorder %s81, %s83
      %p90 = scmp.eq.s32.totalorder %s40, 3
      %p91 = por %p89, %p90
      %p92 = scmp.ne.s32.totalorder %s83, %s84
      %p93 = scmp.eq.s32.totalorder %s40, 0
      %p94 = por %p92, %p93
      %p95 = scmp.ne.s32.totalorder %s83, %s84
      %p96 = scmp.eq.s32.totalorder %s41, 3
      %p97 = por %p95, %p96
      %p99 = scmp.ne.s32.totalorder %s84, %s98
      %p100 = scmp.eq.s32.totalorder %s41, 0
      %p101 = por %p99, %p100
      %s103 = sadd.s32 %s102, 1
      %p106 = scmp.eq.s32.totalorder %s35, 3
      %p107 = scmp.ne.s32.totalorder %s102, %s104
      %p108 = scmp.eq.s32.totalorder %s35, 0
      %p109 = por %p107, %p108
      %p110 = scmp.ne.s32.totalorder %s102, %s104
      %p111 = scmp.eq.s32.totalorder %s40, 3
      %p112 = por %p110, %p111
      %p113 = scmp.ne.s32.totalorder %s104, %s105
      %p114 = scmp.eq.s32.totalorder %s40, 0
      %p115 = por %p113, %p114
      %p116 = scmp.ne.s32.totalorder %s104, %s105
      %p117 = scmp.eq.s32.totalorder %s41, 3
      %p118 = por %p116, %p117
      %p120 = scmp.ne.s32.totalorder %s105, %s119
      %p121 = scmp.eq.s32.totalorder %s41, 0
      %p122 = por %p120, %p121
      %s124 = sadd.s32 %s123, 1
      %p127 = scmp.eq.s32.totalorder %s35, 3
      %p128 = scmp.ne.s32.totalorder %s123, %s125
      %p129 = scmp.eq.s32.totalorder %s35, 0
      %p130 = por %p128, %p129
      %p131 = scmp.ne.s32.totalorder %s123, %s125
      %p132 = scmp.eq.s32.totalorder %s40, 3
      %p133 = por %p131, %p132
      %p134 = scmp.ne.s32.totalorder %s125, %s126
      %p135 = scmp.eq.s32.totalorder %s40, 0
      %p136 = por %p134, %p135
      %p137 = scmp.ne.s32.totalorder %s125, %s126
      %p138 = scmp.eq.s32.totalorder %s41, 3
      %p139 = por %p137, %p138
      %p141 = scmp.ne.s32.totalorder %s126, %s140
      %p142 = scmp.eq.s32.totalorder %s41, 0
      %p143 = por %p141, %p142
      %s145 = sadd.s32 %s144, 1
      %p148 = scmp.eq.s32.totalorder %s35, 3
      %p149 = scmp.ne.s32.totalorder %s144, %s146
      %p150 = scmp.eq.s32.totalorder %s35, 0
      %p151 = por %p149, %p150
      %p152 = scmp.ne.s32.totalorder %s144, %s146
      %p153 = scmp.eq.s32.totalorder %s40, 3
      %p154 = por %p152, %p153
      %p155 = scmp.ne.s32.totalorder %s146, %s147
      %p156 = scmp.eq.s32.totalorder %s40, 0
      %p157 = por %p155, %p156
      %p158 = scmp.ne.s32.totalorder %s146, %s147
      %p159 = scmp.eq.s32.totalorder %s41, 3
      %p160 = por %p158, %p159
      %p162 = scmp.ne.s32.totalorder %s147, %s161
      %p163 = scmp.eq.s32.totalorder %s41, 0
      %p164 = por %p162, %p163
      %s166 = sadd.s32 %s165, 1
      %p169 = scmp.eq.s32.totalorder %s35, 3
      %p170 = scmp.ne.s32.totalorder %s165, %s167
      %p171 = scmp.eq.s32.totalorder %s35, 0
      %p172 = por %p170, %p171
      %p173 = scmp.ne.s32.totalorder %s165, %s167
      %p174 = scmp.eq.s32.totalorder %s40, 3
      %p175 = por %p173, %p174
      %p176 = scmp.ne.s32.totalorder %s167, %s168
      %p177 = scmp.eq.s32.totalorder %s40, 0
      %p178 = por %p176, %p177
      %p179 = scmp.ne.s32.totalorder %s167, %s168
      %p180 = scmp.eq.s32.totalorder %s41, 3
      %p181 = por %p179, %p180
      %p183 = scmp.ne.s32.totalorder %s168, %s182
      %p184 = scmp.eq.s32.totalorder %s41, 0
      %p185 = por %p183, %p184
      %s187 = sadd.s32 %s186, 1
      %p190 = scmp.eq.s32.totalorder %s35, 3
      %p191 = scmp.ne.s32.totalorder %s186, %s188
      %p192 = scmp.eq.s32.totalorder %s35, 0
      %p193 = por %p191, %p192
      %p194 = scmp.ne.s32.totalorder %s186, %s188
      %p195 = scmp.eq.s32.totalorder %s40, 3
      %p196 = por %p194, %p195
      %p197 = scmp.ne.s32.totalorder %s188, %s189
      %p198 = scmp.eq.s32.totalorder %s40, 0
      %p199 = por %p197, %p198
      %p200 = scmp.ne.s32.totalorder %s188, %s189
      %p201 = scmp.eq.s32.totalorder %s41, 3
      %p202 = por %p200, %p201
      %p204 = scmp.ne.s32.totalorder %s189, %s203
      %p205 = scmp.eq.s32.totalorder %s41, 0
      %p206 = por %p204, %p205
      %s208 = sadd.s32 %s207, 1
      %p211 = scmp.eq.s32.totalorder %s35, 3
      %p212 = scmp.ne.s32.totalorder %s207, %s209
      %p213 = scmp.eq.s32.totalorder %s35, 0
      %p214 = por %p212, %p213
      %p215 = scmp.ne.s32.totalorder %s207, %s209
      %p216 = scmp.eq.s32.totalorder %s40, 3
      %p217 = por %p215, %p216
      %p218 = scmp.ne.s32.totalorder %s209, %s210
      %p219 = scmp.eq.s32.totalorder %s40, 0
      %p220 = por %p218, %p219
      %p221 = scmp.ne.s32.totalorder %s209, %s210
      %p222 = scmp.eq.s32.totalorder %s41, 3
      %p223 = por %p221, %p222
      %p225 = scmp.ne.s32.totalorder %s210, %s224
      %p226 = scmp.eq.s32.totalorder %s41, 0
      %p227 = por %p225, %p226
      %s229 = sadd.s32 %s228, 1
      %p232 = scmp.eq.s32.totalorder %s35, 3
      %p233 = scmp.ne.s32.totalorder %s228, %s230
      %p234 = scmp.eq.s32.totalorder %s35, 0
      %p235 = por %p233, %p234
      %p236 = scmp.ne.s32.totalorder %s228, %s230
      %p237 = scmp.eq.s32.totalorder %s40, 3
      %p238 = por %p236, %p237
      %p239 = scmp.ne.s32.totalorder %s230, %s231
      %p240 = scmp.eq.s32.totalorder %s40, 0
      %p241 = por %p239, %p240
      %p242 = scmp.ne.s32.totalorder %s230, %s231
      %p243 = scmp.eq.s32.totalorder %s41, 3
      %p244 = por %p242, %p243
      %p246 = scmp.ne.s32.totalorder %s231, %s245
      %p247 = scmp.eq.s32.totalorder %s41, 0
      %p248 = por %p246, %p247
      %s250 = sadd.s32 %s249, 1
      %p253 = scmp.eq.s32.totalorder %s35, 3
      %p254 = scmp.ne.s32.totalorder %s249, %s251
      %p255 = scmp.eq.s32.totalorder %s35, 0
      %p256 = por %p254, %p255
      %p257 = scmp.ne.s32.totalorder %s249, %s251
      %p258 = scmp.eq.s32.totalorder %s40, 3
      %p259 = por %p257, %p258
      %p260 = scmp.ne.s32.totalorder %s251, %s252
      %p261 = scmp.eq.s32.totalorder %s40, 0
      %p262 = por %p260, %p261
      %p263 = scmp.ne.s32.totalorder %s251, %s252
      %p264 = scmp.eq.s32.totalorder %s41, 3
      %p265 = por %p263, %p264
      %p267 = scmp.ne.s32.totalorder %s252, %s266
      %p268 = scmp.eq.s32.totalorder %s41, 0
      %p269 = por %p267, %p268
      %s271 = sadd.s32 %s270, 1
      %p274 = scmp.eq.s32.totalorder %s35, 3
      %p275 = scmp.ne.s32.totalorder %s270, %s272
      %p276 = scmp.eq.s32.totalorder %s35, 0
      %p277 = por %p275, %p276
      %p278 = scmp.ne.s32.totalorder %s270, %s272
      %p279 = scmp.eq.s32.totalorder %s40, 3
      %p280 = por %p278, %p279
      %p281 = scmp.ne.s32.totalorder %s272, %s273
      %p282 = scmp.eq.s32.totalorder %s40, 0
      %p283 = por %p281, %p282
      %p284 = scmp.ne.s32.totalorder %s272, %s273
      %p285 = scmp.eq.s32.totalorder %s41, 3
      %p286 = por %p284, %p285
      %p288 = scmp.ne.s32.totalorder %s273, %s287
      %p289 = scmp.eq.s32.totalorder %s41, 0
      %p290 = por %p288, %p289
      %s292 = sadd.s32 %s291, 1
      %p295 = scmp.eq.s32.totalorder %s35, 3
      %p296 = scmp.ne.s32.totalorder %s291, %s293
      %p297 = scmp.eq.s32.totalorder %s35, 0
      %p298 = por %p296, %p297
      %p299 = scmp.ne.s32.totalorder %s291, %s293
      %p300 = scmp.eq.s32.totalorder %s40, 3
      %p301 = por %p299, %p300
      %p302 = scmp.ne.s32.totalorder %s293, %s294
      %p303 = scmp.eq.s32.totalorder %s40, 0
      %p304 = por %p302, %p303
      %p305 = scmp.ne.s32.totalorder %s293, %s294
      %p306 = scmp.eq.s32.totalorder %s41, 3
      %p307 = por %p305, %p306
      %p309 = scmp.ne.s32.totalorder %s294, %s308
      %p310 = scmp.eq.s32.totalorder %s41, 0
      %p311 = por %p309, %p310
      %s313 = sadd.s32 %s312, 1
      %p316 = scmp.eq.s32.totalorder %s35, 3
      %p317 = scmp.ne.s32.totalorder %s312, %s314
      %p318 = scmp.eq.s32.totalorder %s35, 0
      %p319 = por %p317, %p318
      %p320 = scmp.ne.s32.totalorder %s312, %s314
      %p321 = scmp.eq.s32.totalorder %s40, 3
      %p322 = por %p320, %p321
      %p323 = scmp.ne.s32.totalorder %s314, %s315
      %p324 = scmp.eq.s32.totalorder %s40, 0
      %p325 = por %p323, %p324
      %p326 = scmp.ne.s32.totalorder %s314, %s315
      %p327 = scmp.eq.s32.totalorder %s41, 3
      %p328 = por %p326, %p327
      %p330 = scmp.ne.s32.totalorder %s315, %s329
      %p331 = scmp.eq.s32.totalorder %s41, 0
      %p332 = por %p330, %p331
      %s334 = sadd.s32 %s333, 1
      %p337 = scmp.eq.s32.totalorder %s35, 3
      %p338 = scmp.ne.s32.totalorder %s333, %s335
      %p339 = scmp.eq.s32.totalorder %s35, 0
      %p340 = por %p338, %p339
      %p341 = scmp.ne.s32.totalorder %s333, %s335
      %p342 = scmp.eq.s32.totalorder %s40, 3
      %p343 = por %p341, %p342
      %p344 = scmp.ne.s32.totalorder %s335, %s336
      %p345 = scmp.eq.s32.totalorder %s40, 0
      %p346 = por %p344, %p345
      %p347 = scmp.ne.s32.totalorder %s335, %s336
      %p348 = scmp.eq.s32.totalorder %s41, 3
      %p349 = por %p347, %p348
      %p351 = scmp.ne.s32.totalorder %s336, %s350
      %p352 = scmp.eq.s32.totalorder %s41, 0
      %p353 = por %p351, %p352
      %s355 = sadd.s32 %s354, 1
      %p358 = scmp.eq.s32.totalorder %s35, 3
      %p359 = scmp.ne.s32.totalorder %s354, %s356
      %p360 = scmp.eq.s32.totalorder %s35, 0
      %p361 = por %p359, %p360
      %p362 = scmp.ne.s32.totalorder %s354, %s356
      %p363 = scmp.eq.s32.totalorder %s40, 3
      %p364 = por %p362, %p363
      %p365 = scmp.ne.s32.totalorder %s356, %s357
      %p366 = scmp.eq.s32.totalorder %s40, 0
      %p367 = por %p365, %p366
      %p368 = scmp.ne.s32.totalorder %s356, %s357
      %p369 = scmp.eq.s32.totalorder %s41, 3
      %p370 = por %p368, %p369
      %p372 = scmp.ne.s32.totalorder %s357, %s371
      %p373 = scmp.eq.s32.totalorder %s41, 0
      %p374 = por %p372, %p373
      %s375 = ssub.s32 %s42, %s54
      %p376 = scmp.eq.s32.totalorder %s375, 0
      %s378 = sadd.s32 %s377, 1
      %s379 = scalar_select %p376, %s377, %s378
      %p382 = pneg %p376
      %p383 = scmp.eq.s32.totalorder %s35, 3
      %p384 = por %p382, %p383
      %p385 = scmp.ne.s32.totalorder %s377, %s380
      %p386 = scmp.eq.s32.totalorder %s35, 0
      %p387 = por %p385, %p386
      %p388 = scmp.ne.s32.totalorder %s377, %s380
      %p389 = scmp.eq.s32.totalorder %s40, 3
      %p390 = por %p388, %p389
      %p391 = scmp.ne.s32.totalorder %s380, %s381
      %p392 = scmp.eq.s32.totalorder %s40, 0
      %p393 = por %p391, %p392
      %p394 = scmp.ne.s32.totalorder %s380, %s381
      %p395 = scmp.eq.s32.totalorder %s41, 3
      %p396 = por %p394, %p395
      %p398 = scmp.ne.s32.totalorder %s381, %s397
      %p399 = scmp.eq.s32.totalorder %s41, 0
      %p400 = por %p398, %p399
      %s401 = ssub.s32 %s43, %s50
      %s402 = ssub.s32 %s42, %s54
      %s403 = sor.u32 %s401, %s402
      %p404 = scmp.eq.s32.totalorder %s403, 0
      %s406 = sadd.s32 %s405, 1
      %s407 = scalar_select %p404, %s405, %s406
      %p410 = pneg %p404
      %p411 = scmp.eq.s32.totalorder %s35, 3
      %p412 = por %p410, %p411
      %p413 = scmp.ne.s32.totalorder %s405, %s408
      %p414 = scmp.eq.s32.totalorder %s35, 0
      %p415 = por %p413, %p414
      %p416 = scmp.ne.s32.totalorder %s405, %s408
      %p417 = scmp.eq.s32.totalorder %s40, 3
      %p418 = por %p416, %p417
      %p419 = scmp.ne.s32.totalorder %s408, %s409
      %p420 = scmp.eq.s32.totalorder %s40, 0
      %p421 = por %p419, %p420
      %p422 = scmp.ne.s32.totalorder %s408, %s409
      %p423 = scmp.eq.s32.totalorder %s41, 3
      %p424 = por %p422, %p423
      %p426 = scmp.ne.s32.totalorder %s409, %s425
      %p427 = scmp.eq.s32.totalorder %s41, 0
      %p428 = por %p426, %p427
      %p429 = scmp.le.s32.totalorder 1, %s35
      %p430 = scmp.lt.s32.totalorder %s35, 5
      %p431 = pnand %p429, %p430
      %p432 = pneg %p431
      // Predicated region
      $region9: #{tpu_custom_call.1} parent=5 // pred_check
        _
      $region10: #{tpu_custom_call.1} parent=5 // pred_check_branch
        %434 = sbr.rel (%p431) target = $region12
      $region11: #{tpu_custom_call.1} parent=5 // pred_region
        %s435 = ssub.s32 %s35, 1
        // Predicated region
        $region13: #{tpu_custom_call.1} parent=11 // pred_check
          %p436 = pneg %p94
        $region14: #{tpu_custom_call.1} parent=11 // pred_check_branch
          %438 = sbr.rel (%p436) target = $region16
        $region15: #{tpu_custom_call.1} parent=11 // pred_region
          %s440 = ssub.s32 2048, 2048
          %441 = vsyncadd [#allocation7], %s440
          %s442 = sshll.u32 [#allocation6], 4
          %s443 = int_to_ptr.vmem [resolvable:$true] %s442
          %448 = dma.hbm_to_vmem [thread:$0]  %s1, 2048, %s443, [#allocation7], 64, 64, 4
        $region16: #{tpu_custom_call.1} parent=11 // pred_fallthru
          _
        // Predicated region
        $region17: #{tpu_custom_call.1} parent=11 // pred_check
          %p449 = pneg %p115
        $region18: #{tpu_custom_call.1} parent=11 // pred_check_branch
          %451 = sbr.rel (%p449) target = $region20
        $region19: #{tpu_custom_call.1} parent=11 // pred_region
          _
        $region20: #{tpu_custom_call.1} parent=11 // pred_fallthru
          _
        // Predicated region
        $region21: #{tpu_custom_call.1} parent=11 // pred_check
          %p452 = pneg %p136
        $region22: #{tpu_custom_call.1} parent=11 // pred_check_branch
          %454 = sbr.rel (%p452) target = $region24
        $region23: #{tpu_custom_call.1} parent=11 // pred_region
          %s456 = ssub.s32 2048, 2048
          %457 = vsyncadd [#allocation7], %s456
          %s458 = sshll.u32 [#allocation8], 4
          %s459 = int_to_ptr.vmem [resolvable:$true] %s458
          %464 = dma.hbm_to_vmem [thread:$0]  %s3, 2048, %s459, [#allocation7], 64, 64, 4
        $region24: #{tpu_custom_call.1} parent=11 // pred_fallthru
          _
        // Predicated region
        $region25: #{tpu_custom_call.1} parent=11 // pred_check
          %p465 = pneg %p157
        $region26: #{tpu_custom_call.1} parent=11 // pred_check_branch
          %467 = sbr.rel (%p465) target = $region28
        $region27: #{tpu_custom_call.1} parent=11 // pred_region
          _
        $region28: #{tpu_custom_call.1} parent=11 // pred_fallthru
          _
        // Predicated region
        $region29: #{tpu_custom_call.1} parent=11 // pred_check
          %p468 = pneg %p178
        $region30: #{tpu_custom_call.1} parent=11 // pred_check_branch
          %470 = sbr.rel (%p468) target = $region32
        $region31: #{tpu_custom_call.1} parent=11 // pred_region
          _
        $region32: #{tpu_custom_call.1} parent=11 // pred_fallthru
          _
        // Predicated region
        $region33: #{tpu_custom_call.1} parent=11 // pred_check
          %p471 = pneg %p199
        $region34: #{tpu_custom_call.1} parent=11 // pred_check_branch
          %473 = sbr.rel (%p471) target = $region36
        $region35: #{tpu_custom_call.1} parent=11 // pred_region
          _
        $region36: #{tpu_custom_call.1} parent=11 // pred_fallthru
          _
        // Predicated region
        $region37: #{tpu_custom_call.1} parent=11 // pred_check
          %p474 = pneg %p220
        $region38: #{tpu_custom_call.1} parent=11 // pred_check_branch
          %476 = sbr.rel (%p474) target = $region40
        $region39: #{tpu_custom_call.1} parent=11 // pred_region
          %s478 = ssub.s32 2048, 2048
          %479 = vsyncadd [#allocation10], %s478
          %s480 = sshll.u32 [#allocation9], 4
          %s481 = int_to_ptr.vmem [resolvable:$true] %s480
          %486 = dma.hbm_to_vmem [thread:$0]  %s7, 2048, %s481, [#allocation10], 64, 64, 4
        $region40: #{tpu_custom_call.1} parent=11 // pred_fallthru
          _
        // Predicated region
        $region41: #{tpu_custom_call.1} parent=11 // pred_check
          %p487 = pneg %p241
        $region42: #{tpu_custom_call.1} parent=11 // pred_check_branch
          %489 = sbr.rel (%p487) target = $region44
        $region43: #{tpu_custom_call.1} parent=11 // pred_region
          _
        $region44: #{tpu_custom_call.1} parent=11 // pred_fallthru
          _
        // Predicated region
        $region45: #{tpu_custom_call.1} parent=11 // pred_check
          %p490 = pneg %p262
        $region46: #{tpu_custom_call.1} parent=11 // pred_check_branch
          %492 = sbr.rel (%p490) target = $region48
        $region47: #{tpu_custom_call.1} parent=11 // pred_region
          %s494 = ssub.s32 2048, 2048
          %495 = vsyncadd [#allocation10], %s494
          %s496 = sshll.u32 [#allocation11], 4
          %s497 = int_to_ptr.vmem [resolvable:$true] %s496
          %502 = dma.hbm_to_vmem [thread:$0]  %s9, 2048, %s497, [#allocation10], 64, 64, 4
        $region48: #{tpu_custom_call.1} parent=11 // pred_fallthru
          _
        // Predicated region
        $region49: #{tpu_custom_call.1} parent=11 // pred_check
          %p503 = pneg %p283
        $region50: #{tpu_custom_call.1} parent=11 // pred_check_branch
          %505 = sbr.rel (%p503) target = $region52
        $region51: #{tpu_custom_call.1} parent=11 // pred_region
          _
        $region52: #{tpu_custom_call.1} parent=11 // pred_fallthru
          _
        // Predicated region
        $region53: #{tpu_custom_call.1} parent=11 // pred_check
          %p506 = pneg %p304
        $region54: #{tpu_custom_call.1} parent=11 // pred_check_branch
          %508 = sbr.rel (%p506) target = $region56
        $region55: #{tpu_custom_call.1} parent=11 // pred_region
          _
        $region56: #{tpu_custom_call.1} parent=11 // pred_fallthru
          _
        // Predicated region
        $region57: #{tpu_custom_call.1} parent=11 // pred_check
          %p509 = pneg %p325
        $region58: #{tpu_custom_call.1} parent=11 // pred_check_branch
          %511 = sbr.rel (%p509) target = $region60
        $region59: #{tpu_custom_call.1} parent=11 // pred_region
          _
        $region60: #{tpu_custom_call.1} parent=11 // pred_fallthru
          _
        // Predicated region
        $region61: #{tpu_custom_call.1} parent=11 // pred_check
          %p512 = pneg %p346
        $region62: #{tpu_custom_call.1} parent=11 // pred_check_branch
          %514 = sbr.rel (%p512) target = $region64
        $region63: #{tpu_custom_call.1} parent=11 // pred_region
          %s516 = ssub.s32 1024, 1024
          %517 = vsyncadd [#allocation13], %s516
          %s518 = sshll.u32 [#allocation12], 4
          %s519 = int_to_ptr.vmem [resolvable:$true] %s518
          %524 = dma.hbm_to_vmem [thread:$0]  %s13, 1024, %s519, [#allocation13], 64, 64, 4
        $region64: #{tpu_custom_call.1} parent=11 // pred_fallthru
          _
        // Predicated region
        $region65: #{tpu_custom_call.1} parent=11 // pred_check
          %p525 = pneg %p367
        $region66: #{tpu_custom_call.1} parent=11 // pred_check_branch
          %527 = sbr.rel (%p525) target = $region68
        $region67: #{tpu_custom_call.1} parent=11 // pred_region
          _
        $region68: #{tpu_custom_call.1} parent=11 // pred_fallthru
          _
      $region12: #{tpu_custom_call.1} parent=5 // pred_fallthru
        _
      %p528 = scmp.lt.s32.totalorder %s35, 4
      // Predicated region
      $region69: #{tpu_custom_call.1} parent=5 // pred_check
        %p529 = pneg %p528
      $region70: #{tpu_custom_call.1} parent=5 // pred_check_branch
        %531 = sbr.rel (%p529) target = $region72
      $region71: #{tpu_custom_call.1} parent=5 // pred_region
        // Predicated region
        $region73: #{tpu_custom_call.1} parent=71 // pred_check
          %p532 = pneg %p67
        $region74: #{tpu_custom_call.1} parent=71 // pred_check_branch
          %534 = sbr.rel (%p532) target = $region76
        $region75: #{tpu_custom_call.1} parent=71 // pred_region
          %s535 = sand.u32 %s57, 1
          %s536 = scalar_lea.sflag [#allocation4], %s535
          %s537 = sand.u32 %s57, 1
          %s538 = smul.addr %s537, 8
          %s539 = scalar_lea.vmem [#allocation3], %s538
          %s541 = ssub.s32 128, 128
          %542 = vsyncadd %s536, %s541
          %s543 = smul.addr %s42, 128
          %s544 = scalar_lea.hbm %s0, %s543
          %s546 = sshll.u32 %s539, 4
          %s547 = int_to_ptr.vmem [resolvable:$true] %s546
          %549 = dma.hbm_to_vmem [thread:$0]  %s544, 128, %s547, %s536
        $region76: #{tpu_custom_call.1} parent=71 // pred_fallthru
          _
      $region72: #{tpu_custom_call.1} parent=5 // pred_fallthru
        _
      %p550 = scmp.le.s32.totalorder 1, %s35
      %p551 = scmp.lt.s32.totalorder %s35, 5
      %p552 = pnand %p550, %p551
      %p553 = pneg %p552
      // Predicated region
      $region77: #{tpu_custom_call.1} parent=5 // pred_check
        _
      $region78: #{tpu_custom_call.1} parent=5 // pred_check_branch
        %555 = sbr.rel (%p552) target = $region80
      $region79: #{tpu_custom_call.1} parent=5 // pred_region
        %s556 = ssub.s32 %s35, 1
        %s557 = sand.u32 %s60, 1
        %s558 = scalar_lea.sflag [#allocation4], %s557
        %s559 = sand.u32 %s60, 1
        %s560 = smul.addr %s559, 8
        %s561 = scalar_lea.vmem [#allocation3], %s560
        // Predicated region
        $region81: #{tpu_custom_call.1} parent=79 // pred_check
          %p562 = pneg %p73
        $region82: #{tpu_custom_call.1} parent=79 // pred_check_branch
          %564 = sbr.rel (%p562) target = $region84
        $region83: #{tpu_custom_call.1} parent=79 // pred_region
          %565 = dma.done %s558, 128
        $region84: #{tpu_custom_call.1} parent=79 // pred_fallthru
          _
        // Predicated region
        $region85: #{tpu_custom_call.1} parent=79 // pred_check
          %p566 = pneg %p94
        $region86: #{tpu_custom_call.1} parent=79 // pred_check_branch
          %568 = sbr.rel (%p566) target = $region88
        $region87: #{tpu_custom_call.1} parent=79 // pred_region
          %569 = dma.done [#allocation7], 2048
        $region88: #{tpu_custom_call.1} parent=79 // pred_fallthru
          _
        // Predicated region
        $region89: #{tpu_custom_call.1} parent=79 // pred_check
          %p570 = pneg %p136
        $region90: #{tpu_custom_call.1} parent=79 // pred_check_branch
          %572 = sbr.rel (%p570) target = $region92
        $region91: #{tpu_custom_call.1} parent=79 // pred_region
          %573 = dma.done [#allocation7], 2048
        $region92: #{tpu_custom_call.1} parent=79 // pred_fallthru
          _
        // Predicated region
        $region93: #{tpu_custom_call.1} parent=79 // pred_check
          %p574 = pneg %p220
        $region94: #{tpu_custom_call.1} parent=79 // pred_check_branch
          %576 = sbr.rel (%p574) target = $region96
        $region95: #{tpu_custom_call.1} parent=79 // pred_region
          %577 = dma.done [#allocation10], 2048
        $region96: #{tpu_custom_call.1} parent=79 // pred_fallthru
          _
        // Predicated region
        $region97: #{tpu_custom_call.1} parent=79 // pred_check
          %p578 = pneg %p262
        $region98: #{tpu_custom_call.1} parent=79 // pred_check_branch
          %580 = sbr.rel (%p578) target = $region100
        $region99: #{tpu_custom_call.1} parent=79 // pred_region
          %581 = dma.done [#allocation10], 2048
        $region100: #{tpu_custom_call.1} parent=79 // pred_fallthru
          _
        // Predicated region
        $region101: #{tpu_custom_call.1} parent=79 // pred_check
          %p582 = pneg %p346
        $region102: #{tpu_custom_call.1} parent=79 // pred_check_branch
          %584 = sbr.rel (%p582) target = $region104
        $region103: #{tpu_custom_call.1} parent=79 // pred_region
          %585 = dma.done [#allocation13], 1024
        $region104: #{tpu_custom_call.1} parent=79 // pred_fallthru
          _
        %s586 = sand.u32 %s60, 1
        %s587 = scalar_lea.sflag [#allocation4], %s586
        %s588 = sand.u32 %s60, 1
        %s589 = smul.addr %s588, 8
        %s590 = scalar_lea.vmem [#allocation3], %s589
        %p591 = pneg %p73
        %p592 = pneg %p70
        %p593 = pneg %p94
        %p594 = pneg %p91
        %p595 = pneg %p115
        %p596 = pneg %p112
        %p597 = pneg %p136
        %p598 = pneg %p133
        %p599 = pneg %p157
        %p600 = pneg %p154
        %p601 = pneg %p178
        %p602 = pneg %p175
        %p603 = pneg %p199
        %p604 = pneg %p196
        %p605 = pneg %p220
        %p606 = pneg %p217
        %p607 = pneg %p241
        %p608 = pneg %p238
        %p609 = pneg %p262
        %p610 = pneg %p259
        %p611 = pneg %p283
        %p612 = pneg %p280
        %p613 = pneg %p304
        %p614 = pneg %p301
        %p615 = pneg %p325
        %p616 = pneg %p322
        %p617 = pneg %p346
        %p618 = pneg %p343
        %p619 = pneg %p367
        %p620 = pneg %p364
        %p621 = pneg %p393
        %p622 = pneg %p390
        %s623 = sand.u32 %s380, 1
        %s624 = scalar_lea.sflag [#allocation5], %s623
        %s625 = sand.u32 %s380, 1
        %s626 = smul.addr %s625, 8
        %s627 = scalar_lea.vmem [#allocation14], %s626
        %p628 = pneg %p421
        %p629 = pneg %p418
        %s630 = sand.u32 %s408, 1
        %s631 = scalar_lea.sflag [#allocation16], %s630
        %s632 = sand.u32 %s408, 1
        %s633 = smul.addr %s632, 4
        %s634 = scalar_lea.vmem [#allocation15], %s633
        %p636 = scmp.eq.s32.totalorder %s45, 0
        // Predicated region
        $region105: #{tpu_custom_call.1} parent=79 // pred_check
          %p637 = pneg %p636
        $region106: #{tpu_custom_call.1} parent=79 // pred_check_branch
          %639 = sbr.rel (%p637) target = $region108
        $region107: #{tpu_custom_call.1} parent=79 // pred_region
          %v640 = vld [vmem:[%s561] sm:$0xff]
          %641 = vst [vmem:[#allocation2] sm:$0xff] %v640
        $region108: #{tpu_custom_call.1} parent=79 // pred_fallthru
          _
        %v642 = vld [vmem:[#allocation2] sm:$0xff]
        %v643 = vpack.c.bf16 %v642, %v642
        %s644 = smul.u32 %s45, 16
        %s645 = smul.addr %s644, 4
        %s646 = scalar_lea.vmem [#allocation6], %s645
        %v647 = vld [vmem:[%s646] sm:$0xf]
        %v648 = vld [vmem:[%s646 + $0x4] sm:$0xf]
        %v649 = vld [vmem:[%s646 + $0x8] sm:$0xf]
        %v650 = vld [vmem:[%s646 + $0xc] sm:$0xf]
        %v651 = vld [vmem:[%s646 + $0x10] sm:$0xf]
        %v652 = vld [vmem:[%s646 + $0x14] sm:$0xf]
        %v653 = vld [vmem:[%s646 + $0x18] sm:$0xf]
        %v654 = vld [vmem:[%s646 + $0x1c] sm:$0xf]
        %v655 = vld [vmem:[%s646 + $0x20] sm:$0xf]
        %v656 = vld [vmem:[%s646 + $0x24] sm:$0xf]
        %v657 = vld [vmem:[%s646 + $0x28] sm:$0xf]
        %v658 = vld [vmem:[%s646 + $0x2c] sm:$0xf]
        %v659 = vld [vmem:[%s646 + $0x30] sm:$0xf]
        %v660 = vld [vmem:[%s646 + $0x34] sm:$0xf]
        %v661 = vld [vmem:[%s646 + $0x38] sm:$0xf]
        %v662 = vld [vmem:[%s646 + $0x3c] sm:$0xf]
        %s663 = scalar_lea.vmem %s2, %s45
        %v664 = vld [vmem:[%s663] sm:$0x1]
        %v666 = vlaneseq
        %v667 = vshrl.u32 %v666, 7
        %v668 = vsub.s32 0, %v667
        %v669 = vrot.slane %v664, %v668
        %v687 = vunpack.c.l.b16 %v647
        %v688 = vunpack.c.l.b16 %v648
        %v689 = vunpack.c.l.b16 %v649
        %v690 = vunpack.c.l.b16 %v650
        %v691 = vunpack.c.l.b16 %v651
        %v692 = vunpack.c.l.b16 %v652
        %v693 = vunpack.c.l.b16 %v653
        %v694 = vunpack.c.l.b16 %v654
        %v695 = vunpack.c.l.b16 %v655
        %v696 = vunpack.c.l.b16 %v656
        %v697 = vunpack.c.l.b16 %v657
        %v698 = vunpack.c.l.b16 %v658
        %v699 = vunpack.c.l.b16 %v659
        %v700 = vunpack.c.l.b16 %v660
        %v701 = vunpack.c.l.b16 %v661
        %v702 = vunpack.c.l.b16 %v662
        %v703 = vpack.c.b16 %v688, %v687
        %v704 = vpack.c.b16 %v690, %v689
        %v705 = vpack.c.b16 %v692, %v691
        %v706 = vpack.c.b16 %v694, %v693
        %v707 = vpack.c.b16 %v696, %v695
        %v708 = vpack.c.b16 %v698, %v697
        %v709 = vpack.c.b16 %v700, %v699
        %v710 = vpack.c.b16 %v702, %v701
        %719 = vmatprep.subr.bf16.mxu0 0
        %720 = vmatpush1.bf16.msra.mxu0 %v703
        %721 = vmatprep.subr.bf16.mxu0 0
        %722 = vmatpush1.bf16.msra.mxu0 %v704
        %723 = vmatprep.subr.bf16.mxu0 0
        %724 = vmatpush1.bf16.msra.mxu0 %v705
        %725 = vmatprep.subr.bf16.mxu0 0
        %726 = vmatpush1.bf16.msra.mxu0 %v706
        %727 = vmatprep.subr.bf16.mxu0 0
        %728 = vmatpush1.bf16.msra.mxu0 %v707
        %729 = vmatprep.subr.bf16.mxu0 0
        %730 = vmatpush1.bf16.msra.mxu0 %v708
        %731 = vmatprep.subr.bf16.mxu0 0
        %732 = vmatpush1.bf16.msra.mxu0 %v709
        %733 = vmatprep.subr.bf16.mxu0 0
        %734 = vmatpush1.bf16.msra.mxu0 %v710
        %735 = vmatprep.subr.bf16.mxu0 0
        %736 = vmatpush1.bf16.msra.mxu0 0
        %737 = vmatprep.subr.bf16.mxu0 0
        %738 = vmatpush1.bf16.msra.mxu0 0
        %739 = vmatprep.subr.bf16.mxu0 0
        %740 = vmatpush1.bf16.msra.mxu0 0
        %741 = vmatprep.subr.bf16.mxu0 0
        %742 = vmatpush1.bf16.msra.mxu0 0
        %743 = vmatprep.subr.bf16.mxu0 0
        %744 = vmatpush1.bf16.msra.mxu0 0
        %745 = vmatprep.subr.bf16.mxu0 0
        %746 = vmatpush1.bf16.msra.mxu0 0
        %747 = vmatprep.subr.bf16.mxu0 0
        %748 = vmatpush1.bf16.msra.mxu0 0
        %749 = vmatprep.subr.bf16.mxu0 0
        %750 = vmatpush1.bf16.msra.mxu0 0
        %751 = vmatprep.mubr.bf16.mxu0 0
        %752 = vmatmul.mubr.bf16.gmra.mrb[0].mxu0 %v643
        %v753 = vpop.f32.mrb[0].mxu0
        %v754 = vadd.f32 %v669, %v753
        %v755 = vpop.f32.mrb[0].mxu0
        %v756 = vpop.f32.mrb[0].mxu0
        %v757 = vpop.f32.mrb[0].mxu0
        %758 = vdwg.mxu0
        %s759 = smul.addr %s644, 4
        %s760 = scalar_lea.vmem [#allocation8], %s759
        %v761 = vld [vmem:[%s760] sm:$0xf]
        %v762 = vld [vmem:[%s760 + $0x4] sm:$0xf]
        %v763 = vld [vmem:[%s760 + $0x8] sm:$0xf]
        %v764 = vld [vmem:[%s760 + $0xc] sm:$0xf]
        %v765 = vld [vmem:[%s760 + $0x10] sm:$0xf]
        %v766 = vld [vmem:[%s760 + $0x14] sm:$0xf]
        %v767 = vld [vmem:[%s760 + $0x18] sm:$0xf]
        %v768 = vld [vmem:[%s760 + $0x1c] sm:$0xf]
        %v769 = vld [vmem:[%s760 + $0x20] sm:$0xf]
        %v770 = vld [vmem:[%s760 + $0x24] sm:$0xf]
        %v771 = vld [vmem:[%s760 + $0x28] sm:$0xf]
        %v772 = vld [vmem:[%s760 + $0x2c] sm:$0xf]
        %v773 = vld [vmem:[%s760 + $0x30] sm:$0xf]
        %v774 = vld [vmem:[%s760 + $0x34] sm:$0xf]
        %v775 = vld [vmem:[%s760 + $0x38] sm:$0xf]
        %v776 = vld [vmem:[%s760 + $0x3c] sm:$0xf]
        %s777 = scalar_lea.vmem %s4, %s45
        %v778 = vld [vmem:[%s777] sm:$0x1]
        %v780 = vlaneseq
        %v781 = vshrl.u32 %v780, 7
        %v782 = vsub.s32 0, %v781
        %v783 = vrot.slane %v778, %v782
        %v801 = vunpack.c.l.b16 %v761
        %v802 = vunpack.c.l.b16 %v762
        %v803 = vunpack.c.l.b16 %v763
        %v804 = vunpack.c.l.b16 %v764
        %v805 = vunpack.c.l.b16 %v765
        %v806 = vunpack.c.l.b16 %v766
        %v807 = vunpack.c.l.b16 %v767
        %v808 = vunpack.c.l.b16 %v768
        %v809 = vunpack.c.l.b16 %v769
        %v810 = vunpack.c.l.b16 %v770
        %v811 = vunpack.c.l.b16 %v771
        %v812 = vunpack.c.l.b16 %v772
        %v813 = vunpack.c.l.b16 %v773
        %v814 = vunpack.c.l.b16 %v774
        %v815 = vunpack.c.l.b16 %v775
        %v816 = vunpack.c.l.b16 %v776
        %v817 = vpack.c.b16 %v802, %v801
        %v818 = vpack.c.b16 %v804, %v803
        %v819 = vpack.c.b16 %v806, %v805
        %v820 = vpack.c.b16 %v808, %v807
        %v821 = vpack.c.b16 %v810, %v809
        %v822 = vpack.c.b16 %v812, %v811
        %v823 = vpack.c.b16 %v814, %v813
        %v824 = vpack.c.b16 %v816, %v815
        %833 = vmatprep.subr.bf16.mxu0 0
        %834 = vmatpush1.bf16.msra.mxu0 %v817
        %835 = vmatprep.subr.bf16.mxu0 0
        %836 = vmatpush1.bf16.msra.mxu0 %v818
        %837 = vmatprep.subr.bf16.mxu0 0
        %838 = vmatpush1.bf16.msra.mxu0 %v819
        %839 = vmatprep.subr.bf16.mxu0 0
        %840 = vmatpush1.bf16.msra.mxu0 %v820
        %841 = vmatprep.subr.bf16.mxu0 0
        %842 = vmatpush1.bf16.msra.mxu0 %v821
        %843 = vmatprep.subr.bf16.mxu0 0
        %844 = vmatpush1.bf16.msra.mxu0 %v822
        %845 = vmatprep.subr.bf16.mxu0 0
        %846 = vmatpush1.bf16.msra.mxu0 %v823
        %847 = vmatprep.subr.bf16.mxu0 0
        %848 = vmatpush1.bf16.msra.mxu0 %v824
        %849 = vmatprep.subr.bf16.mxu0 0
        %850 = vmatpush1.bf16.msra.mxu0 0
        %851 = vmatprep.subr.bf16.mxu0 0
        %852 = vmatpush1.bf16.msra.mxu0 0
        %853 = vmatprep.subr.bf16.mxu0 0
        %854 = vmatpush1.bf16.msra.mxu0 0
        %855 = vmatprep.subr.bf16.mxu0 0
        %856 = vmatpush1.bf16.msra.mxu0 0
        %857 = vmatprep.subr.bf16.mxu0 0
        %858 = vmatpush1.bf16.msra.mxu0 0
        %859 = vmatprep.subr.bf16.mxu0 0
        %860 = vmatpush1.bf16.msra.mxu0 0
        %861 = vmatprep.subr.bf16.mxu0 0
        %862 = vmatpush1.bf16.msra.mxu0 0
        %863 = vmatprep.subr.bf16.mxu0 0
        %864 = vmatpush1.bf16.msra.mxu0 0
        %865 = vmatprep.mubr.bf16.mxu0 0
        %866 = vmatmul.mubr.bf16.gmra.mrb[0].mxu0 %v643
        %v867 = vpop.f32.mrb[0].mxu0
        %v868 = vadd.f32 %v783, %v867
        %v869 = vpop.f32.mrb[0].mxu0
        %v870 = vpop.f32.mrb[0].mxu0
        %v871 = vpop.f32.mrb[0].mxu0
        %872 = vdwg.mxu0
        %v873 = vpack.c.bf16 %v754, %v754
        %v874 = vpack.c.bf16 %v868, %v868
        %875 = vmatprep.subr.bf16.mxu0 0
        %876 = vmatpush1.bf16.xpose.msra.mxu0 %v874
        %877 = vmatprep.subr.bf16.mxu0 0
        %878 = vmatpush1.bf16.xpose.msra.mxu0 0
        %879 = vmatprep.subr.bf16.mxu0 0
        %880 = vmatpush1.bf16.xpose.msra.mxu0 0
        %881 = vmatprep.subr.bf16.mxu0 0
        %882 = vmatpush1.bf16.xpose.msra.mxu0 0
        %883 = vmatprep.subr.bf16.mxu0 0
        %884 = vmatpush1.bf16.xpose.msra.mxu0 0
        %885 = vmatprep.subr.bf16.mxu0 0
        %886 = vmatpush1.bf16.xpose.msra.mxu0 0
        %887 = vmatprep.subr.bf16.mxu0 0
        %888 = vmatpush1.bf16.xpose.msra.mxu0 0
        %889 = vmatprep.subr.bf16.mxu0 0
        %890 = vmatpush1.bf16.xpose.msra.mxu0 0
        %891 = vmatprep.subr.bf16.mxu0 0
        %892 = vmatpush1.bf16.xpose.msra.mxu0 0
        %893 = vmatprep.subr.bf16.mxu0 0
        %894 = vmatpush1.bf16.xpose.msra.mxu0 0
        %895 = vmatprep.subr.bf16.mxu0 0
        %896 = vmatpush1.bf16.xpose.msra.mxu0 0
        %897 = vmatprep.subr.bf16.mxu0 0
        %898 = vmatpush1.bf16.xpose.msra.mxu0 0
        %899 = vmatprep.subr.bf16.mxu0 0
        %900 = vmatpush1.bf16.xpose.msra.mxu0 0
        %901 = vmatprep.subr.bf16.mxu0 0
        %902 = vmatpush1.bf16.xpose.msra.mxu0 0
        %903 = vmatprep.subr.bf16.mxu0 0
        %904 = vmatpush1.bf16.xpose.msra.mxu0 0
        %905 = vmatprep.subr.bf16.mxu0 0
        %906 = vmatpush1.bf16.xpose.msra.mxu0 0
        %907 = vmatprep.mubr.bf16.mxu0 0
        %908 = vmatmul.mubr.bf16.gmra.mrb[0].mxu0 %v873
        %v909 = vpop.f32.mrb[0].mxu0
        %v910 = vadd.f32 0.0, %v909
        %v911 = vpop.f32.mrb[0].mxu0
        %v912 = vpop.f32.mrb[0].mxu0
        %v913 = vpop.f32.mrb[0].mxu0
        %914 = vdwg.mxu0
        %vm915 = vcmask 64512
        %v916 = vsel %vm915, %v910, -inf
        %917 = vmax.xlane.f32.xlu0 %v916
        %v918 = vpop.xlane.xlu0 %917
        %v919 = vsub.f32 %v910, %v918
        %v920 = vmul.f32 %v919, 1.442695
        %v921 = vpow.pop %v920
        %v922 = vsel %vm915, %v921, 0.0
        %923 = vadd.xlane.f32.xlu0 %v922
        %v924 = vpop.xlane.xlu0 %923
        %v925 = vrcp.pop %v924
        %v926 = vmul.f32 %v921, %v925
        %v927 = vpack.c.bf16 %v926, %v926
        %vm928 = vcmask 60416
        %929 = vst.msk [vmem:[%s634] sm:$0xf] %vm928, %v927
        %v931 = vsel %vm915, %v927, 0
        %vm933 = vcmask 1043456
        %v935 = vsel %vm933, %v643, 0
        %937 = vmatprep.subr.bf16.mxu0 0
        %938 = vmatpush1.bf16.msra.mxu0 %v935
        %939 = vmatprep.subr.bf16.mxu0 0
        %940 = vmatpush1.bf16.msra.mxu0 0
        %941 = vmatprep.subr.bf16.mxu0 0
        %942 = vmatpush1.bf16.msra.mxu0 0
        %943 = vmatprep.subr.bf16.mxu0 0
        %944 = vmatpush1.bf16.msra.mxu0 0
        %945 = vmatprep.subr.bf16.mxu0 0
        %946 = vmatpush1.bf16.msra.mxu0 0
        %947 = vmatprep.subr.bf16.mxu0 0
        %948 = vmatpush1.bf16.msra.mxu0 0
        %949 = vmatprep.subr.bf16.mxu0 0
        %950 = vmatpush1.bf16.msra.mxu0 0
        %951 = vmatprep.subr.bf16.mxu0 0
        %952 = vmatpush1.bf16.msra.mxu0 0
        %953 = vmatprep.subr.bf16.mxu0 0
        %954 = vmatpush1.bf16.msra.mxu0 0
        %955 = vmatprep.subr.bf16.mxu0 0
        %956 = vmatpush1.bf16.msra.mxu0 0
        %957 = vmatprep.subr.bf16.mxu0 0
        %958 = vmatpush1.bf16.msra.mxu0 0
        %959 = vmatprep.subr.bf16.mxu0 0
        %960 = vmatpush1.bf16.msra.mxu0 0
        %961 = vmatprep.subr.bf16.mxu0 0
        %962 = vmatpush1.bf16.msra.mxu0 0
        %963 = vmatprep.subr.bf16.mxu0 0
        %964 = vmatpush1.bf16.msra.mxu0 0
        %965 = vmatprep.subr.bf16.mxu0 0
        %966 = vmatpush1.bf16.msra.mxu0 0
        %967 = vmatprep.subr.bf16.mxu0 0
        %968 = vmatpush1.bf16.msra.mxu0 0
        %969 = vmatprep.mubr.bf16.mxu0 0
        %970 = vmatmul.mubr.bf16.gmra.mrb[0].mxu0 %v931
        %v971 = vpop.f32.mrb[0].mxu0
        %v972 = vadd.f32 0.0, %v971
        %v973 = vpop.f32.mrb[0].mxu0
        %v974 = vpop.f32.mrb[0].mxu0
        %v975 = vpop.f32.mrb[0].mxu0
        %976 = vdwg.mxu0
        %v977 = vadd.f32 %v642, %v972
        %s978 = scalar_lea.vmem %s5, %s45
        %v979 = vld [vmem:[%s978] sm:$0x1]
        %s980 = scalar_lea.vmem %s6, %s45
        %v981 = vld [vmem:[%s980] sm:$0x1]
        %982 = vadd.xlane.f32.xlu0 %v977
        %v983 = vpop.xlane.xlu0 %982
        %v984 = vmul.f32 %v983, 0.083333336
        %v985 = vsub.f32 %v977, %v984
        %v986 = vlaneseq
        %v987 = vand.u32 %v986, 127
        %vm988 = vcmp.lt.s32.totalorder %v987, 12
        %v989 = vsel %vm988, %v985, 0.0
        %v990 = vmul.f32 %v989, %v989
        %991 = vadd.xlane.f32.xlu0 %v990
        %v992 = vpop.xlane.xlu0 %991
        %v993 = vmul.f32 %v992, 0.083333336
        %v994 = vadd.f32 %v993, 1e-05
        %v995 = vrsqrt.pop %v994
        %v996 = vmul.f32 %v989, %v995
        %v998 = vlaneseq
        %v999 = vshrl.u32 %v998, 7
        %v1000 = vsub.s32 0, %v999
        %v1001 = vrot.slane %v979, %v1000
        %v1003 = vmul.f32 %v996, %v1001
        %v1005 = vlaneseq
        %v1006 = vshrl.u32 %v1005, 7
        %v1007 = vsub.s32 0, %v1006
        %v1008 = vrot.slane %v981, %v1007
        %v1010 = vadd.f32 %v1003, %v1008
        %v1011 = vpack.c.bf16 %v1010, %v1010
        %s1012 = smul.addr %s644, 4
        %s1013 = scalar_lea.vmem [#allocation9], %s1012
        %v1014 = vld [vmem:[%s1013] sm:$0xf]
        %v1015 = vld [vmem:[%s1013 + $0x4] sm:$0xf]
        %v1016 = vld [vmem:[%s1013 + $0x8] sm:$0xf]
        %v1017 = vld [vmem:[%s1013 + $0xc] sm:$0xf]
        %v1018 = vld [vmem:[%s1013 + $0x10] sm:$0xf]
        %v1019 = vld [vmem:[%s1013 + $0x14] sm:$0xf]
        %v1020 = vld [vmem:[%s1013 + $0x18] sm:$0xf]
        %v1021 = vld [vmem:[%s1013 + $0x1c] sm:$0xf]
        %v1022 = vld [vmem:[%s1013 + $0x20] sm:$0xf]
        %v1023 = vld [vmem:[%s1013 + $0x24] sm:$0xf]
        %v1024 = vld [vmem:[%s1013 + $0x28] sm:$0xf]
        %v1025 = vld [vmem:[%s1013 + $0x2c] sm:$0xf]
        %v1026 = vld [vmem:[%s1013 + $0x30] sm:$0xf]
        %v1027 = vld [vmem:[%s1013 + $0x34] sm:$0xf]
        %v1028 = vld [vmem:[%s1013 + $0x38] sm:$0xf]
        %v1029 = vld [vmem:[%s1013 + $0x3c] sm:$0xf]
        %s1030 = scalar_lea.vmem %s8, %s45
        %v1031 = vld [vmem:[%s1030] sm:$0x1]
        %v1033 = vlaneseq
        %v1034 = vshrl.u32 %v1033, 7
        %v1035 = vsub.s32 0, %v1034
        %v1036 = vrot.slane %v1031, %v1035
        %v1054 = vunpack.c.l.b16 %v1014
        %v1055 = vunpack.c.l.b16 %v1015
        %v1056 = vunpack.c.l.b16 %v1016
        %v1057 = vunpack.c.l.b16 %v1017
        %v1058 = vunpack.c.l.b16 %v1018
        %v1059 = vunpack.c.l.b16 %v1019
        %v1060 = vunpack.c.l.b16 %v1020
        %v1061 = vunpack.c.l.b16 %v1021
        %v1062 = vunpack.c.l.b16 %v1022
        %v1063 = vunpack.c.l.b16 %v1023
        %v1064 = vunpack.c.l.b16 %v1024
        %v1065 = vunpack.c.l.b16 %v1025
        %v1066 = vunpack.c.l.b16 %v1026
        %v1067 = vunpack.c.l.b16 %v1027
        %v1068 = vunpack.c.l.b16 %v1028
        %v1069 = vunpack.c.l.b16 %v1029
        %v1070 = vpack.c.b16 %v1055, %v1054
        %v1071 = vpack.c.b16 %v1057, %v1056
        %v1072 = vpack.c.b16 %v1059, %v1058
        %v1073 = vpack.c.b16 %v1061, %v1060
        %v1074 = vpack.c.b16 %v1063, %v1062
        %v1075 = vpack.c.b16 %v1065, %v1064
        %v1076 = vpack.c.b16 %v1067, %v1066
        %v1077 = vpack.c.b16 %v1069, %v1068
        %1086 = vmatprep.subr.bf16.mxu0 0
        %1087 = vmatpush1.bf16.msra.mxu0 %v1070
        %1088 = vmatprep.subr.bf16.mxu0 0
        %1089 = vmatpush1.bf16.msra.mxu0 %v1071
        %1090 = vmatprep.subr.bf16.mxu0 0
        %1091 = vmatpush1.bf16.msra.mxu0 %v1072
        %1092 = vmatprep.subr.bf16.mxu0 0
        %1093 = vmatpush1.bf16.msra.mxu0 %v1073
        %1094 = vmatprep.subr.bf16.mxu0 0
        %1095 = vmatpush1.bf16.msra.mxu0 %v1074
        %1096 = vmatprep.subr.bf16.mxu0 0
        %1097 = vmatpush1.bf16.msra.mxu0 %v1075
        %1098 = vmatprep.subr.bf16.mxu0 0
        %1099 = vmatpush1.bf16.msra.mxu0 %v1076
        %1100 = vmatprep.subr.bf16.mxu0 0
        %1101 = vmatpush1.bf16.msra.mxu0 %v1077
        %1102 = vmatprep.subr.bf16.mxu0 0
        %1103 = vmatpush1.bf16.msra.mxu0 0
        %1104 = vmatprep.subr.bf16.mxu0 0
        %1105 = vmatpush1.bf16.msra.mxu0 0
        %1106 = vmatprep.subr.bf16.mxu0 0
        %1107 = vmatpush1.bf16.msra.mxu0 0
        %1108 = vmatprep.subr.bf16.mxu0 0
        %1109 = vmatpush1.bf16.msra.mxu0 0
        %1110 = vmatprep.subr.bf16.mxu0 0
        %1111 = vmatpush1.bf16.msra.mxu0 0
        %1112 = vmatprep.subr.bf16.mxu0 0
        %1113 = vmatpush1.bf16.msra.mxu0 0
        %1114 = vmatprep.subr.bf16.mxu0 0
        %1115 = vmatpush1.bf16.msra.mxu0 0
        %1116 = vmatprep.subr.bf16.mxu0 0
        %1117 = vmatpush1.bf16.msra.mxu0 0
        %1118 = vmatprep.mubr.bf16.mxu0 0
        %1119 = vmatmul.mubr.bf16.gmra.mrb[0].mxu0 %v1011
        %v1120 = vpop.f32.mrb[0].mxu0
        %v1121 = vadd.f32 %v1036, %v1120
        %v1122 = vpop.f32.mrb[0].mxu0
        %v1123 = vpop.f32.mrb[0].mxu0
        %v1124 = vpop.f32.mrb[0].mxu0
        %1125 = vdwg.mxu0
        %v1126 = vmax.f32 %v1121, 0.0
        %v1127 = vpack.c.bf16 %v1126, %v1126
        %s1128 = smul.addr %s644, 4
        %s1129 = scalar_lea.vmem [#allocation11], %s1128
        %v1130 = vld [vmem:[%s1129] sm:$0xf]
        %v1131 = vld [vmem:[%s1129 + $0x4] sm:$0xf]
        %v1132 = vld [vmem:[%s1129 + $0x8] sm:$0xf]
        %v1133 = vld [vmem:[%s1129 + $0xc] sm:$0xf]
        %v1134 = vld [vmem:[%s1129 + $0x10] sm:$0xf]
        %v1135 = vld [vmem:[%s1129 + $0x14] sm:$0xf]
        %v1136 = vld [vmem:[%s1129 + $0x18] sm:$0xf]
        %v1137 = vld [vmem:[%s1129 + $0x1c] sm:$0xf]
        %v1138 = vld [vmem:[%s1129 + $0x20] sm:$0xf]
        %v1139 = vld [vmem:[%s1129 + $0x24] sm:$0xf]
        %v1140 = vld [vmem:[%s1129 + $0x28] sm:$0xf]
        %v1141 = vld [vmem:[%s1129 + $0x2c] sm:$0xf]
        %v1142 = vld [vmem:[%s1129 + $0x30] sm:$0xf]
        %v1143 = vld [vmem:[%s1129 + $0x34] sm:$0xf]
        %v1144 = vld [vmem:[%s1129 + $0x38] sm:$0xf]
        %v1145 = vld [vmem:[%s1129 + $0x3c] sm:$0xf]
        %s1146 = scalar_lea.vmem %s10, %s45
        %v1147 = vld [vmem:[%s1146] sm:$0x1]
        %v1149 = vlaneseq
        %v1150 = vshrl.u32 %v1149, 7
        %v1151 = vsub.s32 0, %v1150
        %v1152 = vrot.slane %v1147, %v1151
        %v1170 = vunpack.c.l.b16 %v1130
        %v1171 = vunpack.c.l.b16 %v1131
        %v1172 = vunpack.c.l.b16 %v1132
        %v1173 = vunpack.c.l.b16 %v1133
        %v1174 = vunpack.c.l.b16 %v1134
        %v1175 = vunpack.c.l.b16 %v1135
        %v1176 = vunpack.c.l.b16 %v1136
        %v1177 = vunpack.c.l.b16 %v1137
        %v1178 = vunpack.c.l.b16 %v1138
        %v1179 = vunpack.c.l.b16 %v1139
        %v1180 = vunpack.c.l.b16 %v1140
        %v1181 = vunpack.c.l.b16 %v1141
        %v1182 = vunpack.c.l.b16 %v1142
        %v1183 = vunpack.c.l.b16 %v1143
        %v1184 = vunpack.c.l.b16 %v1144
        %v1185 = vunpack.c.l.b16 %v1145
        %v1186 = vpack.c.b16 %v1171, %v1170
        %v1187 = vpack.c.b16 %v1173, %v1172
        %v1188 = vpack.c.b16 %v1175, %v1174
        %v1189 = vpack.c.b16 %v1177, %v1176
        %v1190 = vpack.c.b16 %v1179, %v1178
        %v1191 = vpack.c.b16 %v1181, %v1180
        %v1192 = vpack.c.b16 %v1183, %v1182
        %v1193 = vpack.c.b16 %v1185, %v1184
        %1202 = vmatprep.subr.bf16.mxu0 0
        %1203 = vmatpush1.bf16.msra.mxu0 %v1186
        %1204 = vmatprep.subr.bf16.mxu0 0
        %1205 = vmatpush1.bf16.msra.mxu0 %v1187
        %1206 = vmatprep.subr.bf16.mxu0 0
        %1207 = vmatpush1.bf16.msra.mxu0 %v1188
        %1208 = vmatprep.subr.bf16.mxu0 0
        %1209 = vmatpush1.bf16.msra.mxu0 %v1189
        %1210 = vmatprep.subr.bf16.mxu0 0
        %1211 = vmatpush1.bf16.msra.mxu0 %v1190
        %1212 = vmatprep.subr.bf16.mxu0 0
        %1213 = vmatpush1.bf16.msra.mxu0 %v1191
        %1214 = vmatprep.subr.bf16.mxu0 0
        %1215 = vmatpush1.bf16.msra.mxu0 %v1192
        %1216 = vmatprep.subr.bf16.mxu0 0
        %1217 = vmatpush1.bf16.msra.mxu0 %v1193
        %1218 = vmatprep.subr.bf16.mxu0 0
        %1219 = vmatpush1.bf16.msra.mxu0 0
        %1220 = vmatprep.subr.bf16.mxu0 0
        %1221 = vmatpush1.bf16.msra.mxu0 0
        %1222 = vmatprep.subr.bf16.mxu0 0
        %1223 = vmatpush1.bf16.msra.mxu0 0
        %1224 = vmatprep.subr.bf16.mxu0 0
        %1225 = vmatpush1.bf16.msra.mxu0 0
        %1226 = vmatprep.subr.bf16.mxu0 0
        %1227 = vmatpush1.bf16.msra.mxu0 0
        %1228 = vmatprep.subr.bf16.mxu0 0
        %1229 = vmatpush1.bf16.msra.mxu0 0
        %1230 = vmatprep.subr.bf16.mxu0 0
        %1231 = vmatpush1.bf16.msra.mxu0 0
        %1232 = vmatprep.subr.bf16.mxu0 0
        %1233 = vmatpush1.bf16.msra.mxu0 0
        %1234 = vmatprep.mubr.bf16.mxu0 0
        %1235 = vmatmul.mubr.bf16.gmra.mrb[0].mxu0 %v1127
        %v1236 = vpop.f32.mrb[0].mxu0
        %v1237 = vadd.f32 %v1152, %v1236
        %v1238 = vpop.f32.mrb[0].mxu0
        %v1239 = vpop.f32.mrb[0].mxu0
        %v1240 = vpop.f32.mrb[0].mxu0
        %1241 = vdwg.mxu0
        %v1242 = vadd.f32 %v1010, %v1237
        %s1243 = scalar_lea.vmem %s11, %s45
        %v1244 = vld [vmem:[%s1243] sm:$0x1]
        %s1245 = scalar_lea.vmem %s12, %s45
        %v1246 = vld [vmem:[%s1245] sm:$0x1]
        %1247 = vadd.xlane.f32.xlu0 %v1242
        %v1248 = vpop.xlane.xlu0 %1247
        %v1249 = vmul.f32 %v1248, 0.083333336
        %v1250 = vsub.f32 %v1242, %v1249
        %v1251 = vsel %vm988, %v1250, 0.0
        %v1252 = vmul.f32 %v1251, %v1251
        %1253 = vadd.xlane.f32.xlu0 %v1252
        %v1254 = vpop.xlane.xlu0 %1253
        %v1255 = vmul.f32 %v1254, 0.083333336
        %v1256 = vadd.f32 %v1255, 1e-05
        %v1257 = vrsqrt.pop %v1256
        %v1258 = vmul.f32 %v1251, %v1257
        %v1260 = vlaneseq
        %v1261 = vshrl.u32 %v1260, 7
        %v1262 = vsub.s32 0, %v1261
        %v1263 = vrot.slane %v1244, %v1262
        %v1265 = vmul.f32 %v1258, %v1263
        %v1267 = vlaneseq
        %v1268 = vshrl.u32 %v1267, 7
        %v1269 = vsub.s32 0, %v1268
        %v1270 = vrot.slane %v1246, %v1269
        %v1272 = vadd.f32 %v1265, %v1270
        %1273 = vst [vmem:[#allocation2] sm:$0xff] %v1272
        %p1274 = scmp.eq.s32.totalorder %s45, 1
        // Predicated region
        $region109: #{tpu_custom_call.1} parent=79 // pred_check
          %p1275 = pneg %p1274
        $region110: #{tpu_custom_call.1} parent=79 // pred_check_branch
          %1277 = sbr.rel (%p1275) target = $region112
        $region111: #{tpu_custom_call.1} parent=79 // pred_region
          %v1278 = vpack.c.bf16 %v1272, %v1272
          %v1279 = vld [vmem:[#allocation12] sm:$0xf]
          %v1280 = vld [vmem:[#allocation12 + $0x4] sm:$0xf]
          %v1281 = vld [vmem:[#allocation12 + $0x8] sm:$0xf]
          %v1282 = vld [vmem:[#allocation12 + $0xc] sm:$0xf]
          %v1283 = vld [vmem:[#allocation12 + $0x10] sm:$0xf]
          %v1284 = vld [vmem:[#allocation12 + $0x14] sm:$0xf]
          %v1285 = vld [vmem:[#allocation12 + $0x18] sm:$0xf]
          %v1286 = vld [vmem:[#allocation12 + $0x1c] sm:$0xf]
          %v1287 = vld [vmem:[#allocation12 + $0x20] sm:$0xf]
          %v1288 = vld [vmem:[#allocation12 + $0x24] sm:$0xf]
          %v1289 = vld [vmem:[#allocation12 + $0x28] sm:$0xf]
          %v1290 = vld [vmem:[#allocation12 + $0x2c] sm:$0xf]
          %v1291 = vld [vmem:[#allocation12 + $0x30] sm:$0xf]
          %v1292 = vld [vmem:[#allocation12 + $0x34] sm:$0xf]
          %v1293 = vld [vmem:[#allocation12 + $0x38] sm:$0xf]
          %v1294 = vld [vmem:[#allocation12 + $0x3c] sm:$0xf]
          %v1295 = vld [vmem:[%s14] sm:$0x1]
          %v1297 = vlaneseq
          %v1298 = vshrl.u32 %v1297, 7
          %v1299 = vsub.s32 0, %v1298
          %v1300 = vrot.slane %v1295, %v1299
          %v1318 = vunpack.c.l.b16 %v1279
          %v1319 = vunpack.c.l.b16 %v1280
          %v1320 = vunpack.c.l.b16 %v1281
          %v1321 = vunpack.c.l.b16 %v1282
          %v1322 = vunpack.c.l.b16 %v1283
          %v1323 = vunpack.c.l.b16 %v1284
          %v1324 = vunpack.c.l.b16 %v1285
          %v1325 = vunpack.c.l.b16 %v1286
          %v1326 = vunpack.c.l.b16 %v1287
          %v1327 = vunpack.c.l.b16 %v1288
          %v1328 = vunpack.c.l.b16 %v1289
          %v1329 = vunpack.c.l.b16 %v1290
          %v1330 = vunpack.c.l.b16 %v1291
          %v1331 = vunpack.c.l.b16 %v1292
          %v1332 = vunpack.c.l.b16 %v1293
          %v1333 = vunpack.c.l.b16 %v1294
          %v1334 = vpack.c.b16 %v1319, %v1318
          %v1335 = vpack.c.b16 %v1321, %v1320
          %v1336 = vpack.c.b16 %v1323, %v1322
          %v1337 = vpack.c.b16 %v1325, %v1324
          %v1338 = vpack.c.b16 %v1327, %v1326
          %v1339 = vpack.c.b16 %v1329, %v1328
          %v1340 = vpack.c.b16 %v1331, %v1330
          %v1341 = vpack.c.b16 %v1333, %v1332
          %1350 = vmatprep.subr.bf16.mxu0 0
          %1351 = vmatpush1.bf16.msra.mxu0 %v1334
          %1352 = vmatprep.subr.bf16.mxu0 0
          %1353 = vmatpush1.bf16.msra.mxu0 %v1335
          %1354 = vmatprep.subr.bf16.mxu0 0
          %1355 = vmatpush1.bf16.msra.mxu0 %v1336
          %1356 = vmatprep.subr.bf16.mxu0 0
          %1357 = vmatpush1.bf16.msra.mxu0 %v1337
          %1358 = vmatprep.subr.bf16.mxu0 0
          %1359 = vmatpush1.bf16.msra.mxu0 %v1338
          %1360 = vmatprep.subr.bf16.mxu0 0
          %1361 = vmatpush1.bf16.msra.mxu0 %v1339
          %1362 = vmatprep.subr.bf16.mxu0 0
          %1363 = vmatpush1.bf16.msra.mxu0 %v1340
          %1364 = vmatprep.subr.bf16.mxu0 0
          %1365 = vmatpush1.bf16.msra.mxu0 %v1341
          %1366 = vmatprep.subr.bf16.mxu0 0
          %1367 = vmatpush1.bf16.msra.mxu0 0
          %1368 = vmatprep.subr.bf16.mxu0 0
          %1369 = vmatpush1.bf16.msra.mxu0 0
          %1370 = vmatprep.subr.bf16.mxu0 0
          %1371 = vmatpush1.bf16.msra.mxu0 0
          %1372 = vmatprep.subr.bf16.mxu0 0
          %1373 = vmatpush1.bf16.msra.mxu0 0
          %1374 = vmatprep.subr.bf16.mxu0 0
          %1375 = vmatpush1.bf16.msra.mxu0 0
          %1376 = vmatprep.subr.bf16.mxu0 0
          %1377 = vmatpush1.bf16.msra.mxu0 0
          %1378 = vmatprep.subr.bf16.mxu0 0
          %1379 = vmatpush1.bf16.msra.mxu0 0
          %1380 = vmatprep.subr.bf16.mxu0 0
          %1381 = vmatpush1.bf16.msra.mxu0 0
          %1382 = vmatprep.mubr.bf16.mxu0 0
          %1383 = vmatmul.mubr.bf16.gmra.mrb[0].mxu0 %v1278
          %v1384 = vpop.f32.mrb[0].mxu0
          %v1385 = vadd.f32 %v1300, %v1384
          %v1386 = vpop.f32.mrb[0].mxu0
          %v1387 = vpop.f32.mrb[0].mxu0
          %v1388 = vpop.f32.mrb[0].mxu0
          %1389 = vdwg.mxu0
          %1390 = vst [vmem:[%s627] sm:$0xff] %v1385
        $region112: #{tpu_custom_call.1} parent=79 // pred_fallthru
          _
        %s1391 = sand.u32 %s380, 1
        %s1392 = scalar_lea.sflag [#allocation5], %s1391
        %s1393 = sand.u32 %s380, 1
        %s1394 = smul.addr %s1393, 8
        %s1395 = scalar_lea.vmem [#allocation14], %s1394
        %s1396 = sand.u32 %s408, 1
        %s1397 = scalar_lea.sflag [#allocation16], %s1396
        %s1398 = sand.u32 %s408, 1
        %s1399 = smul.addr %s1398, 4
        %s1400 = scalar_lea.vmem [#allocation15], %s1399
        // Predicated region
        $region113: #{tpu_custom_call.1} parent=79 // pred_check
          %p1401 = pneg %p390
        $region114: #{tpu_custom_call.1} parent=79 // pred_check_branch
          %1403 = sbr.rel (%p1401) target = $region116
        $region115: #{tpu_custom_call.1} parent=79 // pred_region
          %s1405 = ssub.s32 128, 128
          %1406 = vsyncadd %s1392, %s1405
          %s1407 = smul.addr %s44, 128
          %s1408 = scalar_lea.hbm %s15, %s1407
          %s1410 = sshll.u32 %s1395, 4
          %s1411 = int_to_ptr.vmem [resolvable:$true] %s1410
          %1413 = dma.vmem_to_hbm [thread:$0]  %s1411, 128, %s1408, %s1392
        $region116: #{tpu_custom_call.1} parent=79 // pred_fallthru
          _
        // Predicated region
        $region117: #{tpu_custom_call.1} parent=79 // pred_check
          %p1414 = pneg %p418
        $region118: #{tpu_custom_call.1} parent=79 // pred_check_branch
          %1416 = sbr.rel (%p1414) target = $region120
        $region119: #{tpu_custom_call.1} parent=79 // pred_region
          %s1418 = ssub.s32 64, 64
          %1419 = vsyncadd %s1397, %s1418
          %s1420 = smul.addr %s45, 2
          %s1421 = sadd.s32 %s44, %s1420
          %s1422 = smul.addr %s1421, 64
          %s1423 = scalar_lea.hbm %s16, %s1422
          %s1425 = sshll.u32 %s1400, 4
          %s1426 = int_to_ptr.vmem [resolvable:$true] %s1425
          %1428 = dma.vmem_to_hbm [thread:$0]  %s1426, 64, %s1423, %s1397
        $region120: #{tpu_custom_call.1} parent=79 // pred_fallthru
          _
      $region80: #{tpu_custom_call.1} parent=5 // pred_fallthru
        _
      %p1429 = scmp.le.s32.totalorder 2, %s35
      // Predicated region
      $region121: #{tpu_custom_call.1} parent=5 // pred_check
        %p1430 = pneg %p1429
      $region122: #{tpu_custom_call.1} parent=5 // pred_check_branch
        %1432 = sbr.rel (%p1430) target = $region124
      $region123: #{tpu_custom_call.1} parent=5 // pred_region
        %s1433 = ssub.s32 %s35, 2
        // Predicated region
        $region125: #{tpu_custom_call.1} parent=123 // pred_check
          %p1434 = pneg %p396
        $region126: #{tpu_custom_call.1} parent=123 // pred_check_branch
          %1436 = sbr.rel (%p1434) target = $region128
        $region127: #{tpu_custom_call.1} parent=123 // pred_region
          %s1437 = sand.u32 %s381, 1
          %s1438 = scalar_lea.sflag [#allocation5], %s1437
          %s1439 = sand.u32 %s381, 1
          %s1440 = smul.addr %s1439, 8
          %s1441 = scalar_lea.vmem [#allocation14], %s1440
          %1442 = dma.done %s1438, 128
        $region128: #{tpu_custom_call.1} parent=123 // pred_fallthru
          _
        // Predicated region
        $region129: #{tpu_custom_call.1} parent=123 // pred_check
          %p1443 = pneg %p424
        $region130: #{tpu_custom_call.1} parent=123 // pred_check_branch
          %1445 = sbr.rel (%p1443) target = $region132
        $region131: #{tpu_custom_call.1} parent=123 // pred_region
          %s1446 = sand.u32 %s409, 1
          %s1447 = scalar_lea.sflag [#allocation16], %s1446
          %s1448 = sand.u32 %s409, 1
          %s1449 = smul.addr %s1448, 4
          %s1450 = scalar_lea.vmem [#allocation15], %s1449
          %1451 = dma.done %s1447, 64
        $region132: #{tpu_custom_call.1} parent=123 // pred_fallthru
          _
      $region124: #{tpu_custom_call.1} parent=5 // pred_fallthru
        _
    $region6: #{tpu_custom_call.1} parent=1 // loop_footer
      %s39 = sadd.s32 1, %s35
    $region7: #{tpu_custom_call.1} parent=1 // loop_footer_branch
      %34 = sbr.rel target = $region3
    $region8: #{tpu_custom_call.1} parent=1 // loop_exit
      _
    %1452 = vsyncpa [#allocation4], 1
    %s1453 = scalar_lea.sflag [#allocation4], 1
    %1454 = vsyncpa %s1453, 1
    %1455 = vsyncpa [#allocation7], 1
    %1456 = vsyncpa [#allocation10], 1
    %1457 = vsyncpa [#allocation13], 1
    %1458 = vsyncpa [#allocation5], 1
    %s1459 = scalar_lea.sflag [#allocation5], 1
    %1460 = vsyncpa %s1459, 1
    %1461 = vsyncpa [#allocation16], 1
    %s1462 = scalar_lea.sflag [#allocation16], 1
    %1463 = vsyncpa %s1462, 1

</llo_original>
